<compile_context>
chip_gen: v7x
topology: tpu7x:2x2x1
jax: 0.10.0
libtpu: 0.0.40
codegen_flags: <defaults>
</compile_context>

<pallas_src>
import jax
import jax.numpy as jnp
import numpy as np
from jax.experimental import pallas as pl
from jax.experimental.pallas import tpu as pltpu


# ----------------------------------------------------------------------------
# Fused kernel: one full Up stage for one batch element (grid over N).
# ----------------------------------------------------------------------------
def up_stage_kernel(x_ref, skip_ref, upw_ref, upb_ref,
                    w1_ref, b1_ref, w2_ref, b2_ref,
                    o_ref, cat_ref, h1_ref):
    # x_ref   : (1, Cin,   H,  W )  VMEM   bottleneck features
    # skip_ref: (1, Cskip, Hs, Ws)  VMEM   un-cropped skip connection
    # upw_ref : (Cin*Cup*2*2,)      SMEM   ConvTranspose2d weight (Cin,Cup,2,2) flat
    # upb_ref : (Cup,)              SMEM
    # w1_ref  : (C1out*C1in*3*3,)   SMEM   conv1 weight (Cout,Cin,3,3) flat
    # b1_ref  : (C1out,)            SMEM
    # w2_ref  : (C2out*C1out*3*3,)  SMEM   conv2 weight
    # b2_ref  : (C2out,)            SMEM
    # o_ref   : (1, C2out, 2H-4, 2W-4)  VMEM
    # cat_ref : (C1in,  2H,   2W  )     VMEM scratch: [upsampled | cropped skip]
    # h1_ref  : (C1out, 2H-2, 2W-2)     VMEM scratch: conv1 + ReLU output
    _, Cin, H, W = x_ref.shape
    _, Cskip, Hs, Ws = skip_ref.shape
    Cup = upb_ref.shape[0]
    C1out = b1_ref.shape[0]
    C2out = b2_ref.shape[0]
    C1in = Cup + Cskip
    Hup, Wup = 2 * H, 2 * W
    H1, W1 = Hup - 2, Wup - 2
    H2, W2 = H1 - 2, W1 - 2
    f32 = jnp.float32

    # ---- hoist every scalar weight out of the spatial math (one SMEM read each)
    upw = [[[[upw_ref[((ci * Cup + co) * 2 + kh) * 2 + kw]
              for kw in range(2)] for kh in range(2)]
            for co in range(Cup)] for ci in range(Cin)]
    w1 = [[[[w1_ref[((co * C1in + ci) * 3 + dh) * 3 + dw]
             for dw in range(3)] for dh in range(3)]
           for ci in range(C1in)] for co in range(C1out)]
    w2 = [[[[w2_ref[((co * C1out + ci) * 3 + dh) * 3 + dw]
             for dw in range(3)] for dh in range(3)]
           for ci in range(C1out)] for co in range(C2out)]

    # ---- 0/1 scatter matrices for the stride-2 interleave (built on-chip) ----
    rr = jax.lax.broadcasted_iota(jnp.int32, (Hup, H), 0)
    rc = jax.lax.broadcasted_iota(jnp.int32, (Hup, H), 1)
    Rm = [(rr == 2 * rc + kh).astype(f32) for kh in range(2)]      # (2H, H)
    cr = jax.lax.broadcasted_iota(jnp.int32, (W, Wup), 0)
    cc = jax.lax.broadcasted_iota(jnp.int32, (W, Wup), 1)
    Cm = [(cc == 2 * cr + kw).astype(f32) for kw in range(2)]      # (W, 2W)

    x_planes = [x_ref[0, ci].astype(f32) for ci in range(Cin)]     # (H, W) each

    # ---- ConvTranspose2d(k=2, s=2): interleaved (2H, 2W) plane, straight to VMEM
    # up[2i+kh, 2j+kw] = bias + sum_ci x[ci,i,j] * Wt[ci,co,kh,kw]
    # realized as  sum_{kh,kw}  R_kh @ (sum_ci x[ci]*w) @ C_kw   (tiny MXU matmuls)
    for co in range(Cup):
        up = jnp.zeros((Hup, Wup), f32)
        for kh in range(2):
            pk = jnp.zeros((H, Wup), f32)
            for kw in range(2):
                acc = jnp.zeros((H, W), f32)
                for ci in range(Cin):
                    acc = acc + x_planes[ci] * upw[ci][co][kh][kw]
                pk = pk + jnp.dot(acc, Cm[kw], preferred_element_type=f32)
            up = up + jnp.dot(Rm[kh], pk, preferred_element_type=f32)
        cat_ref[co, :, :] = up + upb_ref[co]

    # ---- CenterCrop(skip) + channel concat [res_up, cropped]; never leaves VMEM
    top = int(round((Hs - Hup) / 2.0))       # torchvision CenterCrop semantics
    left = int(round((Ws - Wup) / 2.0))
    for cs in range(Cskip):
        cat_ref[Cup + cs, :, :] = skip_ref[0, cs, top:top + Hup,
                                           left:left + Wup].astype(f32)

    # ---- Convoluter conv1: 3x3 valid + bias + ReLU ----
    for co in range(C1out):
        acc = jnp.zeros((H1, W1), f32)
        for ci in range(C1in):
            for dh in range(3):
                for dw in range(3):
                    acc = acc + (cat_ref[ci, dh:dh + H1, dw:dw + W1]
                                 * w1[co][ci][dh][dw])
        h1_ref[co, :, :] = jnp.maximum(acc + b1_ref[co], 0.0)

    # ---- Convoluter conv2: 3x3 valid + bias + ReLU ----
    for co in range(C2out):
        acc = jnp.zeros((H2, W2), f32)
        for ci in range(C1out):
            for dh in range(3):
                for dw in range(3):
                    acc = acc + (h1_ref[ci, dh:dh + H2, dw:dw + W2]
                                 * w2[co][ci][dh][dw])
        o_ref[0, co, :, :] = jnp.maximum(acc + b2_ref[co], 0.0)


def up_stage(x, skip, up_w, up_b, c1_w, c1_b, c2_w, c2_b):
    """One fused Up stage: ConvTranspose2x2 + crop + concat + conv3x3x2 + ReLU."""
    N, Cin, H, W = x.shape
    _, Cskip, Hs, Ws = skip.shape
    Cup = up_w.shape[1]
    C1out = c1_w.shape[0]
    C2out = c2_w.shape[0]
    C1in = Cup + Cskip
    Hup, Wup = 2 * H, 2 * W
    Hout, Wout = Hup - 4, Wup - 4

    smem = pl.BlockSpec(memory_space=pltpu.MemorySpace.SMEM)
    return pl.pallas_call(
        up_stage_kernel,
        out_shape=jax.ShapeDtypeStruct((N, C2out, Hout, Wout), jnp.float32),
        grid=(N,),
        in_specs=[
            pl.BlockSpec((1, Cin, H, W), lambda n: (n, 0, 0, 0)),
            pl.BlockSpec((1, Cskip, Hs, Ws), lambda n: (n, 0, 0, 0)),
            smem, smem, smem, smem, smem, smem,
        ],
        out_specs=pl.BlockSpec((1, C2out, Hout, Wout), lambda n: (n, 0, 0, 0)),
        scratch_shapes=[
            pltpu.VMEM((C1in, Hup, Wup), jnp.float32),
            pltpu.VMEM((C1out, Hup - 2, Wup - 2), jnp.float32),
        ],
        compiler_params=pltpu.CompilerParams(
            dimension_semantics=("parallel",)),   # v7x: both TCs; no-op on v5e/v6e
    )(x.astype(jnp.float32), skip.astype(jnp.float32),
      up_w.reshape(-1).astype(jnp.float32), up_b.astype(jnp.float32),
      c1_w.reshape(-1).astype(jnp.float32), c1_b.astype(jnp.float32),
      c2_w.reshape(-1).astype(jnp.float32), c2_b.astype(jnp.float32))


def up_forward(x, down_out, stage_params):
    """Pallas forward of Up. stage_params: list of
    (up_w, up_b, conv1_w, conv1_b, conv2_w, conv2_b) per stage."""
    up_in = x
    for i, (up_w, up_b, c1_w, c1_b, c2_w, c2_b) in enumerate(stage_params):
        up_in = up_stage(up_in, down_out[i], up_w, up_b, c1_w, c1_b, c2_w, c2_b)
    return up_in


# ----------------------------------------------------------------------------
# Pure-JAX reference (for self-check)
# ----------------------------------------------------------------------------
def center_crop(x, Ht, Wt):
    H, W = x.shape[2], x.shape[3]
    top = int(round((H - Ht) / 2.0))
    left = int(round((W - Wt) / 2.0))
    return x[:, :, top:top + Ht, left:left + Wt]


def ref_forward(x, down_out, stage_params):
    up_in = x
    for i, (up_w, up_b, c1_w, c1_b, c2_w, c2_b) in enumerate(stage_params):
        N, Cin, H, W = up_in.shape
        Cout = up_w.shape[1]
        t = jnp.einsum("ncij,cdhw->ndihjw", up_in, up_w).reshape(
            N, Cout, 2 * H, 2 * W
        ) + up_b.reshape(1, -1, 1, 1)
        cropped = center_crop(down_out[i], t.shape[2], t.shape[3])
        cat = jnp.concatenate([t, cropped], axis=1)
        dn = ("NCHW", "OIHW", "NCHW")
        y = jax.lax.conv_general_dilated(cat, c1_w, (1, 1), "VALID",
                                         dimension_numbers=dn)
        y = jnp.maximum(y + c1_b.reshape(1, -1, 1, 1), 0.0)
        y = jax.lax.conv_general_dilated(y, c2_w, (1, 1), "VALID",
                                         dimension_numbers=dn)
        up_in = jnp.maximum(y + c2_b.reshape(1, -1, 1, 1), 0.0)
    return up_in


if __name__ == "__main__":
    channels = [2, 1]
    key = jax.random.PRNGKey(0)
    keys = jax.random.split(key, 8)

    # Parameter shapes match nn.ConvTranspose2d / nn.Conv2d (assumed Convoluter).
    up_w = 0.5 * jax.random.normal(keys[0], (channels[0], channels[1], 2, 2), jnp.float32)
    up_b = 0.1 * jax.random.normal(keys[1], (channels[1],), jnp.float32)
    c1_w = 0.3 * jax.random.normal(keys[2], (channels[1], channels[0], 3, 3), jnp.float32)
    c1_b = 0.1 * jax.random.normal(keys[3], (channels[1],), jnp.float32)
    c2_w = 0.3 * jax.random.normal(keys[4], (channels[1], channels[1], 3, 3), jnp.float32)
    c2_b = 0.1 * jax.random.normal(keys[5], (channels[1],), jnp.float32)
    stage_params = [(up_w, up_b, c1_w, c1_b, c2_w, c2_b)]

    # Inputs: x is the bottleneck feature (NCHW); down_out[0] is the skip.
    x = jax.random.normal(keys[6], (2, channels[0], 8, 8), jnp.float32)
    skip = jax.random.normal(keys[7], (2, channels[1], 20, 20), jnp.float32)
    down_out = [skip]

    out = jax.block_until_ready(up_forward(x, down_out, stage_params))
    ref = jax.block_until_ready(ref_forward(x, down_out, stage_params))

    assert out.shape == (2, channels[1], 12, 12), out.shape
    np.testing.assert_allclose(np.asarray(out), np.asarray(ref), rtol=1e-4, atol=1e-4)
    print("KERNEL_OK")
</pallas_src>

<mosaic_0001>
module attributes {stable_mosaic.version = 11 : i64} {
  func.func @up_stage_kernel(%arg0: i32, %arg1: memref<1x2x8x8xf32, #tpu.memory_space<vmem>>, %arg2: memref<1x1x20x20xf32, #tpu.memory_space<vmem>>, %arg3: memref<8xf32, #tpu.memory_space<smem>>, %arg4: memref<1xf32, #tpu.memory_space<smem>>, %arg5: memref<18xf32, #tpu.memory_space<smem>>, %arg6: memref<1xf32, #tpu.memory_space<smem>>, %arg7: memref<9xf32, #tpu.memory_space<smem>>, %arg8: memref<1xf32, #tpu.memory_space<smem>>, %arg9: memref<1x1x12x12xf32, #tpu.memory_space<vmem>>, %arg10: memref<2x16x16xf32, #tpu.memory_space<vmem>>, %arg11: memref<1x14x14xf32, #tpu.memory_space<vmem>>) attributes {dimension_semantics = [#tpu.dimension_semantics<parallel>], iteration_bounds = array<i64: 2>, scalar_prefetch = 0 : i64, scratch_operands = 2 : i64, tpu.core_type = #tpu.core_type<tc>, window_params = [{transform_indices = @transform_0, window_bounds = array<i64: 1, 2, 8, 8>}, {transform_indices = @transform_1, window_bounds = array<i64: 1, 1, 20, 20>}, {transform_indices = @transform_2, window_bounds = array<i64: 8>}, {transform_indices = @transform_3, window_bounds = array<i64: 1>}, {transform_indices = @transform_4, window_bounds = array<i64: 18>}, {transform_indices = @transform_5, window_bounds = array<i64: 1>}, {transform_indices = @transform_6, window_bounds = array<i64: 9>}, {transform_indices = @transform_7, window_bounds = array<i64: 1>}, {transform_indices = @transform_8, window_bounds = array<i64: 1, 1, 12, 12>}]} {
    %c0 = arith.constant 0 : index
    %0 = memref.load %arg3[%c0] : memref<8xf32, #tpu.memory_space<smem>>
    %c1 = arith.constant 1 : index
    %1 = memref.load %arg3[%c1] : memref<8xf32, #tpu.memory_space<smem>>
    %c2 = arith.constant 2 : index
    %2 = memref.load %arg3[%c2] : memref<8xf32, #tpu.memory_space<smem>>
    %c3 = arith.constant 3 : index
    %3 = memref.load %arg3[%c3] : memref<8xf32, #tpu.memory_space<smem>>
    %c4 = arith.constant 4 : index
    %4 = memref.load %arg3[%c4] : memref<8xf32, #tpu.memory_space<smem>>
    %c5 = arith.constant 5 : index
    %5 = memref.load %arg3[%c5] : memref<8xf32, #tpu.memory_space<smem>>
    %c6 = arith.constant 6 : index
    %6 = memref.load %arg3[%c6] : memref<8xf32, #tpu.memory_space<smem>>
    %c7 = arith.constant 7 : index
    %7 = memref.load %arg3[%c7] : memref<8xf32, #tpu.memory_space<smem>>
    %c0_0 = arith.constant 0 : index
    %8 = memref.load %arg5[%c0_0] : memref<18xf32, #tpu.memory_space<smem>>
    %c1_1 = arith.constant 1 : index
    %9 = memref.load %arg5[%c1_1] : memref<18xf32, #tpu.memory_space<smem>>
    %c2_2 = arith.constant 2 : index
    %10 = memref.load %arg5[%c2_2] : memref<18xf32, #tpu.memory_space<smem>>
    %c3_3 = arith.constant 3 : index
    %11 = memref.load %arg5[%c3_3] : memref<18xf32, #tpu.memory_space<smem>>
    %c4_4 = arith.constant 4 : index
    %12 = memref.load %arg5[%c4_4] : memref<18xf32, #tpu.memory_space<smem>>
    %c5_5 = arith.constant 5 : index
    %13 = memref.load %arg5[%c5_5] : memref<18xf32, #tpu.memory_space<smem>>
    %c6_6 = arith.constant 6 : index
    %14 = memref.load %arg5[%c6_6] : memref<18xf32, #tpu.memory_space<smem>>
    %c7_7 = arith.constant 7 : index
    %15 = memref.load %arg5[%c7_7] : memref<18xf32, #tpu.memory_space<smem>>
    %c8 = arith.constant 8 : index
    %16 = memref.load %arg5[%c8] : memref<18xf32, #tpu.memory_space<smem>>
    %c9 = arith.constant 9 : index
    %17 = memref.load %arg5[%c9] : memref<18xf32, #tpu.memory_space<smem>>
    %c10 = arith.constant 10 : index
    %18 = memref.load %arg5[%c10] : memref<18xf32, #tpu.memory_space<smem>>
    %c11 = arith.constant 11 : index
    %19 = memref.load %arg5[%c11] : memref<18xf32, #tpu.memory_space<smem>>
    %c12 = arith.constant 12 : index
    %20 = memref.load %arg5[%c12] : memref<18xf32, #tpu.memory_space<smem>>
    %c13 = arith.constant 13 : index
    %21 = memref.load %arg5[%c13] : memref<18xf32, #tpu.memory_space<smem>>
    %c14 = arith.constant 14 : index
    %22 = memref.load %arg5[%c14] : memref<18xf32, #tpu.memory_space<smem>>
    %c15 = arith.constant 15 : index
    %23 = memref.load %arg5[%c15] : memref<18xf32, #tpu.memory_space<smem>>
    %c16 = arith.constant 16 : index
    %24 = memref.load %arg5[%c16] : memref<18xf32, #tpu.memory_space<smem>>
    %c17 = arith.constant 17 : index
    %25 = memref.load %arg5[%c17] : memref<18xf32, #tpu.memory_space<smem>>
    %c0_8 = arith.constant 0 : index
    %26 = memref.load %arg7[%c0_8] : memref<9xf32, #tpu.memory_space<smem>>
    %c1_9 = arith.constant 1 : index
    %27 = memref.load %arg7[%c1_9] : memref<9xf32, #tpu.memory_space<smem>>
    %c2_10 = arith.constant 2 : index
    %28 = memref.load %arg7[%c2_10] : memref<9xf32, #tpu.memory_space<smem>>
    %c3_11 = arith.constant 3 : index
    %29 = memref.load %arg7[%c3_11] : memref<9xf32, #tpu.memory_space<smem>>
    %c4_12 = arith.constant 4 : index
    %30 = memref.load %arg7[%c4_12] : memref<9xf32, #tpu.memory_space<smem>>
    %c5_13 = arith.constant 5 : index
    %31 = memref.load %arg7[%c5_13] : memref<9xf32, #tpu.memory_space<smem>>
    %c6_14 = arith.constant 6 : index
    %32 = memref.load %arg7[%c6_14] : memref<9xf32, #tpu.memory_space<smem>>
    %c7_15 = arith.constant 7 : index
    %33 = memref.load %arg7[%c7_15] : memref<9xf32, #tpu.memory_space<smem>>
    %c8_16 = arith.constant 8 : index
    %34 = memref.load %arg7[%c8_16] : memref<9xf32, #tpu.memory_space<smem>>
    %35 = tpu.iota {dimensions = array<i32: 0>} : vector<16x8xi32>
    %36 = tpu.iota {dimensions = array<i32: 1>} : vector<16x8xi32>
    %c2_i32 = arith.constant 2 : i32
    %37 = vector.broadcast %c2_i32 : i32 to vector<16x8xi32>
    %38 = arith.muli %37, %36 : vector<16x8xi32>
    %c0_i32 = arith.constant 0 : i32
    %39 = vector.broadcast %c0_i32 : i32 to vector<16x8xi32>
    %40 = arith.addi %38, %39 : vector<16x8xi32>
    %41 = arith.cmpi eq, %35, %40 : vector<16x8xi32>
    %42 = arith.extui %41 : vector<16x8xi1> to vector<16x8xi32>
    %43 = arith.sitofp %42 : vector<16x8xi32> to vector<16x8xf32>
    %c2_i32_17 = arith.constant 2 : i32
    %44 = vector.broadcast %c2_i32_17 : i32 to vector<16x8xi32>
    %45 = arith.muli %44, %36 : vector<16x8xi32>
    %c1_i32 = arith.constant 1 : i32
    %46 = vector.broadcast %c1_i32 : i32 to vector<16x8xi32>
    %47 = arith.addi %45, %46 : vector<16x8xi32>
    %48 = arith.cmpi eq, %35, %47 : vector<16x8xi32>
    %49 = arith.extui %48 : vector<16x8xi1> to vector<16x8xi32>
    %50 = arith.sitofp %49 : vector<16x8xi32> to vector<16x8xf32>
    %51 = tpu.iota {dimensions = array<i32: 0>} : vector<8x16xi32>
    %52 = tpu.iota {dimensions = array<i32: 1>} : vector<8x16xi32>
    %c2_i32_18 = arith.constant 2 : i32
    %53 = vector.broadcast %c2_i32_18 : i32 to vector<8x16xi32>
    %54 = arith.muli %53, %51 : vector<8x16xi32>
    %c0_i32_19 = arith.constant 0 : i32
    %55 = vector.broadcast %c0_i32_19 : i32 to vector<8x16xi32>
    %56 = arith.addi %54, %55 : vector<8x16xi32>
    %57 = arith.cmpi eq, %52, %56 : vector<8x16xi32>
    %58 = arith.extui %57 : vector<8x16xi1> to vector<8x16xi32>
    %59 = arith.sitofp %58 : vector<8x16xi32> to vector<8x16xf32>
    %c2_i32_20 = arith.constant 2 : i32
    %60 = vector.broadcast %c2_i32_20 : i32 to vector<8x16xi32>
    %61 = arith.muli %60, %51 : vector<8x16xi32>
    %c1_i32_21 = arith.constant 1 : i32
    %62 = vector.broadcast %c1_i32_21 : i32 to vector<8x16xi32>
    %63 = arith.addi %61, %62 : vector<8x16xi32>
    %64 = arith.cmpi eq, %52, %63 : vector<8x16xi32>
    %65 = arith.extui %64 : vector<8x16xi1> to vector<8x16xi32>
    %66 = arith.sitofp %65 : vector<8x16xi32> to vector<8x16xf32>
    %c0_22 = arith.constant 0 : index
    %c0_23 = arith.constant 0 : index
    %c0_24 = arith.constant 0 : index
    %c0_25 = arith.constant 0 : index
    %67 = vector.load %arg1[%c0_22, %c0_23, %c0_24, %c0_25] : memref<1x2x8x8xf32, #tpu.memory_space<vmem>>, vector<1x1x8x8xf32>
    %68 = vector.shape_cast %67 : vector<1x1x8x8xf32> to vector<8x8xf32>
    %c0_26 = arith.constant 0 : index
    %c1_27 = arith.constant 1 : index
    %c0_28 = arith.constant 0 : index
    %c0_29 = arith.constant 0 : index
    %69 = vector.load %arg1[%c0_26, %c1_27, %c0_28, %c0_29] : memref<1x2x8x8xf32, #tpu.memory_space<vmem>>, vector<1x1x8x8xf32>
    %70 = vector.shape_cast %69 : vector<1x1x8x8xf32> to vector<8x8xf32>
    %cst = arith.constant 0.000000e+00 : f32
    %71 = vector.broadcast %cst : f32 to vector<16x16xf32>
    %cst_30 = arith.constant 0.000000e+00 : f32
    %72 = vector.broadcast %cst_30 : f32 to vector<8x16xf32>
    %cst_31 = arith.constant 0.000000e+00 : f32
    %73 = vector.broadcast %cst_31 : f32 to vector<8x8xf32>
    %74 = vector.broadcast %0 : f32 to vector<8x8xf32>
    %75 = arith.mulf %68, %74 : vector<8x8xf32>
    %76 = arith.addf %73, %75 : vector<8x8xf32>
    %77 = vector.broadcast %4 : f32 to vector<8x8xf32>
    %78 = arith.mulf %70, %77 : vector<8x8xf32>
    %79 = arith.addf %76, %78 : vector<8x8xf32>
    %cst_32 = arith.constant dense<0.000000e+00> : vector<8x16xf32>
    %80 = tpu.matmul %79, %59, %cst_32 {dimension_numbers = #tpu.dot_dimension_numbers<[1], [0], [0], [1], [0, 0, 1, 1], [], []>} : vector<8x8xf32>, vector<8x16xf32>, vector<8x16xf32> -> vector<8x16xf32>
    %81 = arith.addf %72, %80 : vector<8x16xf32>
    %cst_33 = arith.constant 0.000000e+00 : f32
    %82 = vector.broadcast %cst_33 : f32 to vector<8x8xf32>
    %83 = vector.broadcast %1 : f32 to vector<8x8xf32>
    %84 = arith.mulf %68, %83 : vector<8x8xf32>
    %85 = arith.addf %82, %84 : vector<8x8xf32>
    %86 = vector.broadcast %5 : f32 to vector<8x8xf32>
    %87 = arith.mulf %70, %86 : vector<8x8xf32>
    %88 = arith.addf %85, %87 : vector<8x8xf32>
    %cst_34 = arith.constant dense<0.000000e+00> : vector<8x16xf32>
    %89 = tpu.matmul %88, %66, %cst_34 {dimension_numbers = #tpu.dot_dimension_numbers<[1], [0], [0], [1], [0, 0, 1, 1], [], []>} : vector<8x8xf32>, vector<8x16xf32>, vector<8x16xf32> -> vector<8x16xf32>
    %90 = arith.addf %81, %89 : vector<8x16xf32>
    %cst_35 = arith.constant dense<0.000000e+00> : vector<16x16xf32>
    %91 = tpu.matmul %43, %90, %cst_35 {dimension_numbers = #tpu.dot_dimension_numbers<[1], [0], [0], [1], [0, 0, 1, 1], [], []>} : vector<16x8xf32>, vector<8x16xf32>, vector<16x16xf32> -> vector<16x16xf32>
    %92 = arith.addf %71, %91 : vector<16x16xf32>
    %cst_36 = arith.constant 0.000000e+00 : f32
    %93 = vector.broadcast %cst_36 : f32 to vector<8x16xf32>
    %cst_37 = arith.constant 0.000000e+00 : f32
    %94 = vector.broadcast %cst_37 : f32 to vector<8x8xf32>
    %95 = vector.broadcast %2 : f32 to vector<8x8xf32>
    %96 = arith.mulf %68, %95 : vector<8x8xf32>
    %97 = arith.addf %94, %96 : vector<8x8xf32>
    %98 = vector.broadcast %6 : f32 to vector<8x8xf32>
    %99 = arith.mulf %70, %98 : vector<8x8xf32>
    %100 = arith.addf %97, %99 : vector<8x8xf32>
    %cst_38 = arith.constant dense<0.000000e+00> : vector<8x16xf32>
    %101 = tpu.matmul %100, %59, %cst_38 {dimension_numbers = #tpu.dot_dimension_numbers<[1], [0], [0], [1], [0, 0, 1, 1], [], []>} : vector<8x8xf32>, vector<8x16xf32>, vector<8x16xf32> -> vector<8x16xf32>
    %102 = arith.addf %93, %101 : vector<8x16xf32>
    %cst_39 = arith.constant 0.000000e+00 : f32
    %103 = vector.broadcast %cst_39 : f32 to vector<8x8xf32>
    %104 = vector.broadcast %3 : f32 to vector<8x8xf32>
    %105 = arith.mulf %68, %104 : vector<8x8xf32>
    %106 = arith.addf %103, %105 : vector<8x8xf32>
    %107 = vector.broadcast %7 : f32 to vector<8x8xf32>
    %108 = arith.mulf %70, %107 : vector<8x8xf32>
    %109 = arith.addf %106, %108 : vector<8x8xf32>
    %cst_40 = arith.constant dense<0.000000e+00> : vector<8x16xf32>
    %110 = tpu.matmul %109, %66, %cst_40 {dimension_numbers = #tpu.dot_dimension_numbers<[1], [0], [0], [1], [0, 0, 1, 1], [], []>} : vector<8x8xf32>, vector<8x16xf32>, vector<8x16xf32> -> vector<8x16xf32>
    %111 = arith.addf %102, %110 : vector<8x16xf32>
    %cst_41 = arith.constant dense<0.000000e+00> : vector<16x16xf32>
    %112 = tpu.matmul %50, %111, %cst_41 {dimension_numbers = #tpu.dot_dimension_numbers<[1], [0], [0], [1], [0, 0, 1, 1], [], []>} : vector<16x8xf32>, vector<8x16xf32>, vector<16x16xf32> -> vector<16x16xf32>
    %113 = arith.addf %92, %112 : vector<16x16xf32>
    %c0_42 = arith.constant 0 : index
    %114 = memref.load %arg4[%c0_42] : memref<1xf32, #tpu.memory_space<smem>>
    %115 = vector.broadcast %114 : f32 to vector<16x16xf32>
    %116 = arith.addf %113, %115 : vector<16x16xf32>
    %c0_43 = arith.constant 0 : index
    %c0_44 = arith.constant 0 : index
    %c0_45 = arith.constant 0 : index
    %117 = vector.load %arg10[%c0_43, %c0_44, %c0_45] : memref<2x16x16xf32, #tpu.memory_space<vmem>>, vector<1x16x16xf32>
    %118 = vector.shape_cast %117 : vector<1x16x16xf32> to vector<16x16xf32>
    %119 = vector.shape_cast %116 : vector<16x16xf32> to vector<1x16x16xf32>
    tpu.vector_store %arg10[%c0_43, %c0_44, %c0_45], %119 {strides = array<i32>} : memref<2x16x16xf32, #tpu.memory_space<vmem>>, vector<1x16x16xf32>,
    %c0_46 = arith.constant 0 : index
    %c0_47 = arith.constant 0 : index
    %c2_48 = arith.constant 2 : index
    %c2_49 = arith.constant 2 : index
    %120 = vector.load %arg2[%c0_46, %c0_47, %c2_48, %c2_49] : memref<1x1x20x20xf32, #tpu.memory_space<vmem>>, vector<1x1x16x16xf32>
    %121 = vector.shape_cast %120 : vector<1x1x16x16xf32> to vector<16x16xf32>
    %c1_50 = arith.constant 1 : index
    %c0_51 = arith.constant 0 : index
    %c0_52 = arith.constant 0 : index
    %122 = vector.load %arg10[%c1_50, %c0_51, %c0_52] : memref<2x16x16xf32, #tpu.memory_space<vmem>>, vector<1x16x16xf32>
    %123 = vector.shape_cast %122 : vector<1x16x16xf32> to vector<16x16xf32>
    %124 = vector.shape_cast %121 : vector<16x16xf32> to vector<1x16x16xf32>
    tpu.vector_store %arg10[%c1_50, %c0_51, %c0_52], %124 {strides = array<i32>} : memref<2x16x16xf32, #tpu.memory_space<vmem>>, vector<1x16x16xf32>,
    %cst_53 = arith.constant 0.000000e+00 : f32
    %125 = vector.broadcast %cst_53 : f32 to vector<14x14xf32>
    %c0_54 = arith.constant 0 : index
    %c0_55 = arith.constant 0 : index
    %c0_56 = arith.constant 0 : index
    %126 = vector.load %arg10[%c0_54, %c0_55, %c0_56] : memref<2x16x16xf32, #tpu.memory_space<vmem>>, vector<1x14x14xf32>
    %127 = vector.shape_cast %126 : vector<1x14x14xf32> to vector<14x14xf32>
    %128 = vector.broadcast %8 : f32 to vector<14x14xf32>
    %129 = arith.mulf %127, %128 : vector<14x14xf32>
    %130 = arith.addf %125, %129 : vector<14x14xf32>
    %c0_57 = arith.constant 0 : index
    %c0_58 = arith.constant 0 : index
    %c1_59 = arith.constant 1 : index
    %131 = vector.load %arg10[%c0_57, %c0_58, %c1_59] : memref<2x16x16xf32, #tpu.memory_space<vmem>>, vector<1x14x14xf32>
    %132 = vector.shape_cast %131 : vector<1x14x14xf32> to vector<14x14xf32>
    %133 = vector.broadcast %9 : f32 to vector<14x14xf32>
    %134 = arith.mulf %132, %133 : vector<14x14xf32>
    %135 = arith.addf %130, %134 : vector<14x14xf32>
    %c0_60 = arith.constant 0 : index
    %c0_61 = arith.constant 0 : index
    %c2_62 = arith.constant 2 : index
    %136 = vector.load %arg10[%c0_60, %c0_61, %c2_62] : memref<2x16x16xf32, #tpu.memory_space<vmem>>, vector<1x14x14xf32>
    %137 = vector.shape_cast %136 : vector<1x14x14xf32> to vector<14x14xf32>
    %138 = vector.broadcast %10 : f32 to vector<14x14xf32>
    %139 = arith.mulf %137, %138 : vector<14x14xf32>
    %140 = arith.addf %135, %139 : vector<14x14xf32>
    %c0_63 = arith.constant 0 : index
    %c1_64 = arith.constant 1 : index
    %c0_65 = arith.constant 0 : index
    %141 = vector.load %arg10[%c0_63, %c1_64, %c0_65] : memref<2x16x16xf32, #tpu.memory_space<vmem>>, vector<1x14x14xf32>
    %142 = vector.shape_cast %141 : vector<1x14x14xf32> to vector<14x14xf32>
    %143 = vector.broadcast %11 : f32 to vector<14x14xf32>
    %144 = arith.mulf %142, %143 : vector<14x14xf32>
    %145 = arith.addf %140, %144 : vector<14x14xf32>
    %c0_66 = arith.constant 0 : index
    %c1_67 = arith.constant 1 : index
    %c1_68 = arith.constant 1 : index
    %146 = vector.load %arg10[%c0_66, %c1_67, %c1_68] : memref<2x16x16xf32, #tpu.memory_space<vmem>>, vector<1x14x14xf32>
    %147 = vector.shape_cast %146 : vector<1x14x14xf32> to vector<14x14xf32>
    %148 = vector.broadcast %12 : f32 to vector<14x14xf32>
    %149 = arith.mulf %147, %148 : vector<14x14xf32>
    %150 = arith.addf %145, %149 : vector<14x14xf32>
    %c0_69 = arith.constant 0 : index
    %c1_70 = arith.constant 1 : index
    %c2_71 = arith.constant 2 : index
    %151 = vector.load %arg10[%c0_69, %c1_70, %c2_71] : memref<2x16x16xf32, #tpu.memory_space<vmem>>, vector<1x14x14xf32>
    %152 = vector.shape_cast %151 : vector<1x14x14xf32> to vector<14x14xf32>
    %153 = vector.broadcast %13 : f32 to vector<14x14xf32>
    %154 = arith.mulf %152, %153 : vector<14x14xf32>
    %155 = arith.addf %150, %154 : vector<14x14xf32>
    %c0_72 = arith.constant 0 : index
    %c2_73 = arith.constant 2 : index
    %c0_74 = arith.constant 0 : index
    %156 = vector.load %arg10[%c0_72, %c2_73, %c0_74] : memref<2x16x16xf32, #tpu.memory_space<vmem>>, vector<1x14x14xf32>
    %157 = vector.shape_cast %156 : vector<1x14x14xf32> to vector<14x14xf32>
    %158 = vector.broadcast %14 : f32 to vector<14x14xf32>
    %159 = arith.mulf %157, %158 : vector<14x14xf32>
    %160 = arith.addf %155, %159 : vector<14x14xf32>
    %c0_75 = arith.constant 0 : index
    %c2_76 = arith.constant 2 : index
    %c1_77 = arith.constant 1 : index
    %161 = vector.load %arg10[%c0_75, %c2_76, %c1_77] : memref<2x16x16xf32, #tpu.memory_space<vmem>>, vector<1x14x14xf32>
    %162 = vector.shape_cast %161 : vector<1x14x14xf32> to vector<14x14xf32>
    %163 = vector.broadcast %15 : f32 to vector<14x14xf32>
    %164 = arith.mulf %162, %163 : vector<14x14xf32>
    %165 = arith.addf %160, %164 : vector<14x14xf32>
    %c0_78 = arith.constant 0 : index
    %c2_79 = arith.constant 2 : index
    %c2_80 = arith.constant 2 : index
    %166 = vector.load %arg10[%c0_78, %c2_79, %c2_80] : memref<2x16x16xf32, #tpu.memory_space<vmem>>, vector<1x14x14xf32>
    %167 = vector.shape_cast %166 : vector<1x14x14xf32> to vector<14x14xf32>
    %168 = vector.broadcast %16 : f32 to vector<14x14xf32>
    %169 = arith.mulf %167, %168 : vector<14x14xf32>
    %170 = arith.addf %165, %169 : vector<14x14xf32>
    %c1_81 = arith.constant 1 : index
    %c0_82 = arith.constant 0 : index
    %c0_83 = arith.constant 0 : index
    %171 = vector.load %arg10[%c1_81, %c0_82, %c0_83] : memref<2x16x16xf32, #tpu.memory_space<vmem>>, vector<1x14x14xf32>
    %172 = vector.shape_cast %171 : vector<1x14x14xf32> to vector<14x14xf32>
    %173 = vector.broadcast %17 : f32 to vector<14x14xf32>
    %174 = arith.mulf %172, %173 : vector<14x14xf32>
    %175 = arith.addf %170, %174 : vector<14x14xf32>
    %c1_84 = arith.constant 1 : index
    %c0_85 = arith.constant 0 : index
    %c1_86 = arith.constant 1 : index
    %176 = vector.load %arg10[%c1_84, %c0_85, %c1_86] : memref<2x16x16xf32, #tpu.memory_space<vmem>>, vector<1x14x14xf32>
    %177 = vector.shape_cast %176 : vector<1x14x14xf32> to vector<14x14xf32>
    %178 = vector.broadcast %18 : f32 to vector<14x14xf32>
    %179 = arith.mulf %177, %178 : vector<14x14xf32>
    %180 = arith.addf %175, %179 : vector<14x14xf32>
    %c1_87 = arith.constant 1 : index
    %c0_88 = arith.constant 0 : index
    %c2_89 = arith.constant 2 : index
    %181 = vector.load %arg10[%c1_87, %c0_88, %c2_89] : memref<2x16x16xf32, #tpu.memory_space<vmem>>, vector<1x14x14xf32>
    %182 = vector.shape_cast %181 : vector<1x14x14xf32> to vector<14x14xf32>
    %183 = vector.broadcast %19 : f32 to vector<14x14xf32>
    %184 = arith.mulf %182, %183 : vector<14x14xf32>
    %185 = arith.addf %180, %184 : vector<14x14xf32>
    %c1_90 = arith.constant 1 : index
    %c1_91 = arith.constant 1 : index
    %c0_92 = arith.constant 0 : index
    %186 = vector.load %arg10[%c1_90, %c1_91, %c0_92] : memref<2x16x16xf32, #tpu.memory_space<vmem>>, vector<1x14x14xf32>
    %187 = vector.shape_cast %186 : vector<1x14x14xf32> to vector<14x14xf32>
    %188 = vector.broadcast %20 : f32 to vector<14x14xf32>
    %189 = arith.mulf %187, %188 : vector<14x14xf32>
    %190 = arith.addf %185, %189 : vector<14x14xf32>
    %c1_93 = arith.constant 1 : index
    %c1_94 = arith.constant 1 : index
    %c1_95 = arith.constant 1 : index
    %191 = vector.load %arg10[%c1_93, %c1_94, %c1_95] : memref<2x16x16xf32, #tpu.memory_space<vmem>>, vector<1x14x14xf32>
    %192 = vector.shape_cast %191 : vector<1x14x14xf32> to vector<14x14xf32>
    %193 = vector.broadcast %21 : f32 to vector<14x14xf32>
    %194 = arith.mulf %192, %193 : vector<14x14xf32>
    %195 = arith.addf %190, %194 : vector<14x14xf32>
    %c1_96 = arith.constant 1 : index
    %c1_97 = arith.constant 1 : index
    %c2_98 = arith.constant 2 : index
    %196 = vector.load %arg10[%c1_96, %c1_97, %c2_98] : memref<2x16x16xf32, #tpu.memory_space<vmem>>, vector<1x14x14xf32>
    %197 = vector.shape_cast %196 : vector<1x14x14xf32> to vector<14x14xf32>
    %198 = vector.broadcast %22 : f32 to vector<14x14xf32>
    %199 = arith.mulf %197, %198 : vector<14x14xf32>
    %200 = arith.addf %195, %199 : vector<14x14xf32>
    %c1_99 = arith.constant 1 : index
    %c2_100 = arith.constant 2 : index
    %c0_101 = arith.constant 0 : index
    %201 = vector.load %arg10[%c1_99, %c2_100, %c0_101] : memref<2x16x16xf32, #tpu.memory_space<vmem>>, vector<1x14x14xf32>
    %202 = vector.shape_cast %201 : vector<1x14x14xf32> to vector<14x14xf32>
    %203 = vector.broadcast %23 : f32 to vector<14x14xf32>
    %204 = arith.mulf %202, %203 : vector<14x14xf32>
    %205 = arith.addf %200, %204 : vector<14x14xf32>
    %c1_102 = arith.constant 1 : index
    %c2_103 = arith.constant 2 : index
    %c1_104 = arith.constant 1 : index
    %206 = vector.load %arg10[%c1_102, %c2_103, %c1_104] : memref<2x16x16xf32, #tpu.memory_space<vmem>>, vector<1x14x14xf32>
    %207 = vector.shape_cast %206 : vector<1x14x14xf32> to vector<14x14xf32>
    %208 = vector.broadcast %24 : f32 to vector<14x14xf32>
    %209 = arith.mulf %207, %208 : vector<14x14xf32>
    %210 = arith.addf %205, %209 : vector<14x14xf32>
    %c1_105 = arith.constant 1 : index
    %c2_106 = arith.constant 2 : index
    %c2_107 = arith.constant 2 : index
    %211 = vector.load %arg10[%c1_105, %c2_106, %c2_107] : memref<2x16x16xf32, #tpu.memory_space<vmem>>, vector<1x14x14xf32>
    %212 = vector.shape_cast %211 : vector<1x14x14xf32> to vector<14x14xf32>
    %213 = vector.broadcast %25 : f32 to vector<14x14xf32>
    %214 = arith.mulf %212, %213 : vector<14x14xf32>
    %215 = arith.addf %210, %214 : vector<14x14xf32>
    %c0_108 = arith.constant 0 : index
    %216 = memref.load %arg6[%c0_108] : memref<1xf32, #tpu.memory_space<smem>>
    %217 = vector.broadcast %216 : f32 to vector<14x14xf32>
    %218 = arith.addf %215, %217 : vector<14x14xf32>
    %cst_109 = arith.constant 0.000000e+00 : f32
    %219 = vector.broadcast %cst_109 : f32 to vector<14x14xf32>
    %220 = arith.maximumf %218, %219 : vector<14x14xf32>
    %c0_110 = arith.constant 0 : index
    %c0_111 = arith.constant 0 : index
    %c0_112 = arith.constant 0 : index
    %221 = vector.load %arg11[%c0_110, %c0_111, %c0_112] : memref<1x14x14xf32, #tpu.memory_space<vmem>>, vector<1x14x14xf32>
    %222 = vector.shape_cast %221 : vector<1x14x14xf32> to vector<14x14xf32>
    %223 = vector.shape_cast %220 : vector<14x14xf32> to vector<1x14x14xf32>
    tpu.vector_store %arg11[%c0_110, %c0_111, %c0_112], %223 {strides = array<i32>} : memref<1x14x14xf32, #tpu.memory_space<vmem>>, vector<1x14x14xf32>,
    %cst_113 = arith.constant 0.000000e+00 : f32
    %224 = vector.broadcast %cst_113 : f32 to vector<12x12xf32>
    %c0_114 = arith.constant 0 : index
    %c0_115 = arith.constant 0 : index
    %c0_116 = arith.constant 0 : index
    %225 = vector.load %arg11[%c0_114, %c0_115, %c0_116] : memref<1x14x14xf32, #tpu.memory_space<vmem>>, vector<1x12x12xf32>
    %226 = vector.shape_cast %225 : vector<1x12x12xf32> to vector<12x12xf32>
    %227 = vector.broadcast %26 : f32 to vector<12x12xf32>
    %228 = arith.mulf %226, %227 : vector<12x12xf32>
    %229 = arith.addf %224, %228 : vector<12x12xf32>
    %c0_117 = arith.constant 0 : index
    %c0_118 = arith.constant 0 : index
    %c1_119 = arith.constant 1 : index
    %230 = vector.load %arg11[%c0_117, %c0_118, %c1_119] : memref<1x14x14xf32, #tpu.memory_space<vmem>>, vector<1x12x12xf32>
    %231 = vector.shape_cast %230 : vector<1x12x12xf32> to vector<12x12xf32>
    %232 = vector.broadcast %27 : f32 to vector<12x12xf32>
    %233 = arith.mulf %231, %232 : vector<12x12xf32>
    %234 = arith.addf %229, %233 : vector<12x12xf32>
    %c0_120 = arith.constant 0 : index
    %c0_121 = arith.constant 0 : index
    %c2_122 = arith.constant 2 : index
    %235 = vector.load %arg11[%c0_120, %c0_121, %c2_122] : memref<1x14x14xf32, #tpu.memory_space<vmem>>, vector<1x12x12xf32>
    %236 = vector.shape_cast %235 : vector<1x12x12xf32> to vector<12x12xf32>
    %237 = vector.broadcast %28 : f32 to vector<12x12xf32>
    %238 = arith.mulf %236, %237 : vector<12x12xf32>
    %239 = arith.addf %234, %238 : vector<12x12xf32>
    %c0_123 = arith.constant 0 : index
    %c1_124 = arith.constant 1 : index
    %c0_125 = arith.constant 0 : index
    %240 = vector.load %arg11[%c0_123, %c1_124, %c0_125] : memref<1x14x14xf32, #tpu.memory_space<vmem>>, vector<1x12x12xf32>
    %241 = vector.shape_cast %240 : vector<1x12x12xf32> to vector<12x12xf32>
    %242 = vector.broadcast %29 : f32 to vector<12x12xf32>
    %243 = arith.mulf %241, %242 : vector<12x12xf32>
    %244 = arith.addf %239, %243 : vector<12x12xf32>
    %c0_126 = arith.constant 0 : index
    %c1_127 = arith.constant 1 : index
    %c1_128 = arith.constant 1 : index
    %245 = vector.load %arg11[%c0_126, %c1_127, %c1_128] : memref<1x14x14xf32, #tpu.memory_space<vmem>>, vector<1x12x12xf32>
    %246 = vector.shape_cast %245 : vector<1x12x12xf32> to vector<12x12xf32>
    %247 = vector.broadcast %30 : f32 to vector<12x12xf32>
    %248 = arith.mulf %246, %247 : vector<12x12xf32>
    %249 = arith.addf %244, %248 : vector<12x12xf32>
    %c0_129 = arith.constant 0 : index
    %c1_130 = arith.constant 1 : index
    %c2_131 = arith.constant 2 : index
    %250 = vector.load %arg11[%c0_129, %c1_130, %c2_131] : memref<1x14x14xf32, #tpu.memory_space<vmem>>, vector<1x12x12xf32>
    %251 = vector.shape_cast %250 : vector<1x12x12xf32> to vector<12x12xf32>
    %252 = vector.broadcast %31 : f32 to vector<12x12xf32>
    %253 = arith.mulf %251, %252 : vector<12x12xf32>
    %254 = arith.addf %249, %253 : vector<12x12xf32>
    %c0_132 = arith.constant 0 : index
    %c2_133 = arith.constant 2 : index
    %c0_134 = arith.constant 0 : index
    %255 = vector.load %arg11[%c0_132, %c2_133, %c0_134] : memref<1x14x14xf32, #tpu.memory_space<vmem>>, vector<1x12x12xf32>
    %256 = vector.shape_cast %255 : vector<1x12x12xf32> to vector<12x12xf32>
    %257 = vector.broadcast %32 : f32 to vector<12x12xf32>
    %258 = arith.mulf %256, %257 : vector<12x12xf32>
    %259 = arith.addf %254, %258 : vector<12x12xf32>
    %c0_135 = arith.constant 0 : index
    %c2_136 = arith.constant 2 : index
    %c1_137 = arith.constant 1 : index
    %260 = vector.load %arg11[%c0_135, %c2_136, %c1_137] : memref<1x14x14xf32, #tpu.memory_space<vmem>>, vector<1x12x12xf32>
    %261 = vector.shape_cast %260 : vector<1x12x12xf32> to vector<12x12xf32>
    %262 = vector.broadcast %33 : f32 to vector<12x12xf32>
    %263 = arith.mulf %261, %262 : vector<12x12xf32>
    %264 = arith.addf %259, %263 : vector<12x12xf32>
    %c0_138 = arith.constant 0 : index
    %c2_139 = arith.constant 2 : index
    %c2_140 = arith.constant 2 : index
    %265 = vector.load %arg11[%c0_138, %c2_139, %c2_140] : memref<1x14x14xf32, #tpu.memory_space<vmem>>, vector<1x12x12xf32>
    %266 = vector.shape_cast %265 : vector<1x12x12xf32> to vector<12x12xf32>
    %267 = vector.broadcast %34 : f32 to vector<12x12xf32>
    %268 = arith.mulf %266, %267 : vector<12x12xf32>
    %269 = arith.addf %264, %268 : vector<12x12xf32>
    %c0_141 = arith.constant 0 : index
    %270 = memref.load %arg8[%c0_141] : memref<1xf32, #tpu.memory_space<smem>>
    %271 = vector.broadcast %270 : f32 to vector<12x12xf32>
    %272 = arith.addf %269, %271 : vector<12x12xf32>
    %cst_142 = arith.constant 0.000000e+00 : f32
    %273 = vector.broadcast %cst_142 : f32 to vector<12x12xf32>
    %274 = arith.maximumf %272, %273 : vector<12x12xf32>
    %c0_143 = arith.constant 0 : index
    %c0_144 = arith.constant 0 : index
    %c0_145 = arith.constant 0 : index
    %c0_146 = arith.constant 0 : index
    %275 = vector.load %arg9[%c0_143, %c0_144, %c0_145, %c0_146] : memref<1x1x12x12xf32, #tpu.memory_space<vmem>>, vector<1x1x12x12xf32>
    %276 = vector.shape_cast %275 : vector<1x1x12x12xf32> to vector<12x12xf32>
    %277 = vector.shape_cast %274 : vector<12x12xf32> to vector<1x1x12x12xf32>
    tpu.vector_store %arg9[%c0_143, %c0_144, %c0_145, %c0_146], %277 {strides = array<i32>} : memref<1x1x12x12xf32, #tpu.memory_space<vmem>>, vector<1x1x12x12xf32>,
    return
  }
  func.func @transform_0(%arg0: i32) -> (i32, i32, i32, i32) {
    %c0_i32 = arith.constant 0 : i32
    %c0_i32_0 = arith.constant 0 : i32
    %c0_i32_1 = arith.constant 0 : i32
    %c0_i32_2 = arith.constant 0 : i32
    return %arg0, %c0_i32, %c0_i32_0, %c0_i32_1 : i32, i32, i32, i32
  }
  func.func @transform_1(%arg0: i32) -> (i32, i32, i32, i32) {
    %c0_i32 = arith.constant 0 : i32
    %c0_i32_0 = arith.constant 0 : i32
    %c0_i32_1 = arith.constant 0 : i32
    %c0_i32_2 = arith.constant 0 : i32
    return %arg0, %c0_i32, %c0_i32_0, %c0_i32_1 : i32, i32, i32, i32
  }
  func.func @transform_2(%arg0: i32) -> i32 {
    %c0_i32 = arith.constant 0 : i32
    %c0_i32_0 = arith.constant 0 : i32
    return %c0_i32 : i32
  }
  func.func @transform_3(%arg0: i32) -> i32 {
    %c0_i32 = arith.constant 0 : i32
    %c0_i32_0 = arith.constant 0 : i32
    return %c0_i32 : i32
  }
  func.func @transform_4(%arg0: i32) -> i32 {
    %c0_i32 = arith.constant 0 : i32
    %c0_i32_0 = arith.constant 0 : i32
    return %c0_i32 : i32
  }
  func.func @transform_5(%arg0: i32) -> i32 {
    %c0_i32 = arith.constant 0 : i32
    %c0_i32_0 = arith.constant 0 : i32
    return %c0_i32 : i32
  }
  func.func @transform_6(%arg0: i32) -> i32 {
    %c0_i32 = arith.constant 0 : i32
    %c0_i32_0 = arith.constant 0 : i32
    return %c0_i32 : i32
  }
  func.func @transform_7(%arg0: i32) -> i32 {
    %c0_i32 = arith.constant 0 : i32
    %c0_i32_0 = arith.constant 0 : i32
    return %c0_i32 : i32
  }
  func.func @transform_8(%arg0: i32) -> (i32, i32, i32, i32) {
    %c0_i32 = arith.constant 0 : i32
    %c0_i32_0 = arith.constant 0 : i32
    %c0_i32_1 = arith.constant 0 : i32
    %c0_i32_2 = arith.constant 0 : i32
    return %arg0, %c0_i32, %c0_i32_0, %c0_i32_1 : i32, i32, i32, i32
  }
}

</mosaic_0001>

<llo_original>
// kernel: tpu_custom_call.1
$region0: #{tpu_custom_call.1}
  #allocation0 [shape = 'u32[]', space=smem, size = 0x4, offset = 0x4, fixed_abs, tag = 'smem constant byte address 0x4 - core index']
  #allocation1 [shape = 'u32[144,128]{1,0:T(1,128)}', space=vmem, size = 0x12000, scoped, tag = 'internal scratch']
  #allocation2 [shape = 'f32[2,16,16]{2,1,0:T(8,128)}', space=vmem, size = 0x4000, scoped, tag = 'scratch operand']
  #allocation3 [shape = 'f32[1,14,14]{2,1,0:T(8,128)}', space=vmem, size = 0x2000, scoped, tag = 'scratch operand']
  #allocation4 [shape = 'f32[1]{0:T(128)S(6)}', space=smem, size = 0x200, scoped, tag = 'scoped memory for tpu_custom_call.1']
  #allocation5 [shape = 'f32[1]{0:T(128)S(6)}', space=smem, size = 0x200, scoped, tag = 'scoped memory for tpu_custom_call.1']
  #allocation6 [shape = 'f32[1]{0:T(128)S(6)}', space=smem, size = 0x200, scoped, tag = 'scoped memory for tpu_custom_call.1']
  %s0 = inlined_call_operand.vmem [shape: f32[2,2,8,8], index: 0, kind: input, shape index: {}]
  %s1 = inlined_call_operand.vmem [shape: f32[2,1,20,20], index: 1, kind: input, shape index: {}]
  %s2 = inlined_call_operand.vmem [shape: f32[8], index: 2, kind: input, shape index: {}]
  %s3 = inlined_call_operand.<no memory space> [shape: f32[1], index: 3, kind: input, shape index: {}]
  %s4 = inlined_call_operand.vmem [shape: f32[18], index: 4, kind: input, shape index: {}]
  %s5 = inlined_call_operand.<no memory space> [shape: f32[1], index: 5, kind: input, shape index: {}]
  %s6 = inlined_call_operand.vmem [shape: f32[9], index: 6, kind: input, shape index: {}]
  %s7 = inlined_call_operand.<no memory space> [shape: f32[1], index: 7, kind: input, shape index: {}]
  %s8 = inlined_call_operand.vmem [shape: f32[2,1,12,12], index: 8, kind: output, shape index: {}]
  %s9 = sld [smem:[#allocation0]]
  $region77: #{tpu_custom_call.1} parent=0
    _
  %s11 = ssub.s32 1, %s9
  %s12 = scalar_select 0, %s11, %s9
  %13 = sst [smem:[#allocation4]] %s3
  %14 = sst [smem:[#allocation5]] %s5
  %15 = sst [smem:[#allocation6]] %s7
  $region1: #{tpu_custom_call.1} parent=0
    #allocation7 [shape = 'u8[512]{0}', space=smem, size = 0x200, scoped, tag = 'input window, operand 2, single buffered']
    #allocation8 [shape = 's32[2]{0}', space=sflag, size = 0x8, scoped, tag = 'scoped memory for tpu_custom_call.1']
    #allocation9 [shape = 'u8[512]{0}', space=smem, size = 0x200, scoped, tag = 'input window, operand 4, single buffered']
    #allocation10 [shape = 's32[1]{0}', space=sflag, size = 0x4, scoped, tag = 'scoped memory for tpu_custom_call.1']
    #allocation11 [shape = 'u8[512]{0}', space=smem, size = 0x200, scoped, tag = 'input window, operand 6, single buffered']
    %16 = vsyncpa [#allocation8], 0
    %17 = vsyncpa [#allocation10], 0
    loop: start=0, step=1, limit=4
    $region2: #{tpu_custom_call.1} parent=1 // loop_pre_header
      _
    $region3: #{tpu_custom_call.1} parent=1 // loop_header
      %s19 = sphi 0, %s23
      %p20 = scmp.ge.s32.totalorder %s19, 4
      %s29 = sphi 0, %s31
      %s32 = sphi 0, %s29
      %s33 = sphi 0, %s32
      %s49 = sphi 0, %s33
      %s55 = sphi 0, %s57
      %s58 = sphi 0, %s55
      %s59 = sphi 0, %s58
      %s75 = sphi 0, %s59
      %s79 = sphi 0, %s79
      %s81 = sphi 0, %s79
      %s82 = sphi 0, %s81
      %s96 = sphi 0, %s82
      %s100 = sphi 0, %s100
      %s102 = sphi 0, %s100
      %s103 = sphi 0, %s102
      %s117 = sphi 0, %s103
      %s121 = sphi 0, %s121
      %s123 = sphi 0, %s121
      %s124 = sphi 0, %s123
      %s138 = sphi 0, %s124
      %s142 = sphi 0, %s142
      %s144 = sphi 0, %s142
      %s145 = sphi 0, %s144
      %s159 = sphi 0, %s145
      %s163 = sphi 0, %s163
      %s165 = sphi 0, %s163
      %s166 = sphi 0, %s165
      %s180 = sphi 0, %s166
      %s184 = sphi 0, %s184
      %s186 = sphi 0, %s184
      %s187 = sphi 0, %s186
      %s201 = sphi 0, %s187
      %s207 = sphi 0, %s209
      %s210 = sphi 0, %s207
      %s211 = sphi 0, %s210
      %s227 = sphi 0, %s211
    $region4: #{tpu_custom_call.1} parent=1 // loop_header_branch
      %22 = sbr.rel (%p20) target = $region8
    $region5: #{tpu_custom_call.1} parent=1 // loop_body
      %s24 = ssub.s32 %s19, 1
      %s25 = ssub.s32 %s19, 2
      %s26 = sadd.s32 %s19, 1
      %s27 = ssub.s32 %s19, %s26
      %p28 = scmp.eq.s32.totalorder %s27, 0
      %s30 = sadd.s32 %s29, 1
      %s31 = scalar_select %p28, %s29, %s30
      %p34 = pneg %p28
      %p35 = scmp.eq.s32.totalorder %s19, 1
      %p36 = por %p34, %p35
      %p37 = scmp.ne.s32.totalorder %s29, %s32
      %p38 = scmp.eq.s32.totalorder %s19, 0
      %p39 = por %p37, %p38
      %p40 = scmp.ne.s32.totalorder %s29, %s32
      %p41 = scmp.eq.s32.totalorder %s24, 1
      %p42 = por %p40, %p41
      %p43 = scmp.ne.s32.totalorder %s32, %s33
      %p44 = scmp.eq.s32.totalorder %s24, 0
      %p45 = por %p43, %p44
      %p46 = scmp.ne.s32.totalorder %s32, %s33
      %p47 = scmp.eq.s32.totalorder %s25, 1
      %p48 = por %p46, %p47
      %p50 = scmp.ne.s32.totalorder %s33, %s49
      %p51 = scmp.eq.s32.totalorder %s25, 0
      %p52 = por %p50, %p51
      %s53 = ssub.s32 %s19, %s26
      %p54 = scmp.eq.s32.totalorder %s53, 0
      %s56 = sadd.s32 %s55, 1
      %s57 = scalar_select %p54, %s55, %s56
      %p60 = pneg %p54
      %p61 = scmp.eq.s32.totalorder %s19, 1
      %p62 = por %p60, %p61
      %p63 = scmp.ne.s32.totalorder %s55, %s58
      %p64 = scmp.eq.s32.totalorder %s19, 0
      %p65 = por %p63, %p64
      %p66 = scmp.ne.s32.totalorder %s55, %s58
      %p67 = scmp.eq.s32.totalorder %s24, 1
      %p68 = por %p66, %p67
      %p69 = scmp.ne.s32.totalorder %s58, %s59
      %p70 = scmp.eq.s32.totalorder %s24, 0
      %p71 = por %p69, %p70
      %p72 = scmp.ne.s32.totalorder %s58, %s59
      %p73 = scmp.eq.s32.totalorder %s25, 1
      %p74 = por %p72, %p73
      %p76 = scmp.ne.s32.totalorder %s59, %s75
      %p77 = scmp.eq.s32.totalorder %s25, 0
      %p78 = por %p76, %p77
      %s80 = sadd.s32 %s79, 1
      %p83 = scmp.eq.s32.totalorder %s19, 1
      %p84 = scmp.ne.s32.totalorder %s79, %s81
      %p85 = scmp.eq.s32.totalorder %s19, 0
      %p86 = por %p84, %p85
      %p87 = scmp.ne.s32.totalorder %s79, %s81
      %p88 = scmp.eq.s32.totalorder %s24, 1
      %p89 = por %p87, %p88
      %p90 = scmp.ne.s32.totalorder %s81, %s82
      %p91 = scmp.eq.s32.totalorder %s24, 0
      %p92 = por %p90, %p91
      %p93 = scmp.ne.s32.totalorder %s81, %s82
      %p94 = scmp.eq.s32.totalorder %s25, 1
      %p95 = por %p93, %p94
      %p97 = scmp.ne.s32.totalorder %s82, %s96
      %p98 = scmp.eq.s32.totalorder %s25, 0
      %p99 = por %p97, %p98
      %s101 = sadd.s32 %s100, 1
      %p104 = scmp.eq.s32.totalorder %s19, 1
      %p105 = scmp.ne.s32.totalorder %s100, %s102
      %p106 = scmp.eq.s32.totalorder %s19, 0
      %p107 = por %p105, %p106
      %p108 = scmp.ne.s32.totalorder %s100, %s102
      %p109 = scmp.eq.s32.totalorder %s24, 1
      %p110 = por %p108, %p109
      %p111 = scmp.ne.s32.totalorder %s102, %s103
      %p112 = scmp.eq.s32.totalorder %s24, 0
      %p113 = por %p111, %p112
      %p114 = scmp.ne.s32.totalorder %s102, %s103
      %p115 = scmp.eq.s32.totalorder %s25, 1
      %p116 = por %p114, %p115
      %p118 = scmp.ne.s32.totalorder %s103, %s117
      %p119 = scmp.eq.s32.totalorder %s25, 0
      %p120 = por %p118, %p119
      %s122 = sadd.s32 %s121, 1
      %p125 = scmp.eq.s32.totalorder %s19, 1
      %p126 = scmp.ne.s32.totalorder %s121, %s123
      %p127 = scmp.eq.s32.totalorder %s19, 0
      %p128 = por %p126, %p127
      %p129 = scmp.ne.s32.totalorder %s121, %s123
      %p130 = scmp.eq.s32.totalorder %s24, 1
      %p131 = por %p129, %p130
      %p132 = scmp.ne.s32.totalorder %s123, %s124
      %p133 = scmp.eq.s32.totalorder %s24, 0
      %p134 = por %p132, %p133
      %p135 = scmp.ne.s32.totalorder %s123, %s124
      %p136 = scmp.eq.s32.totalorder %s25, 1
      %p137 = por %p135, %p136
      %p139 = scmp.ne.s32.totalorder %s124, %s138
      %p140 = scmp.eq.s32.totalorder %s25, 0
      %p141 = por %p139, %p140
      %s143 = sadd.s32 %s142, 1
      %p146 = scmp.eq.s32.totalorder %s19, 1
      %p147 = scmp.ne.s32.totalorder %s142, %s144
      %p148 = scmp.eq.s32.totalorder %s19, 0
      %p149 = por %p147, %p148
      %p150 = scmp.ne.s32.totalorder %s142, %s144
      %p151 = scmp.eq.s32.totalorder %s24, 1
      %p152 = por %p150, %p151
      %p153 = scmp.ne.s32.totalorder %s144, %s145
      %p154 = scmp.eq.s32.totalorder %s24, 0
      %p155 = por %p153, %p154
      %p156 = scmp.ne.s32.totalorder %s144, %s145
      %p157 = scmp.eq.s32.totalorder %s25, 1
      %p158 = por %p156, %p157
      %p160 = scmp.ne.s32.totalorder %s145, %s159
      %p161 = scmp.eq.s32.totalorder %s25, 0
      %p162 = por %p160, %p161
      %s164 = sadd.s32 %s163, 1
      %p167 = scmp.eq.s32.totalorder %s19, 1
      %p168 = scmp.ne.s32.totalorder %s163, %s165
      %p169 = scmp.eq.s32.totalorder %s19, 0
      %p170 = por %p168, %p169
      %p171 = scmp.ne.s32.totalorder %s163, %s165
      %p172 = scmp.eq.s32.totalorder %s24, 1
      %p173 = por %p171, %p172
      %p174 = scmp.ne.s32.totalorder %s165, %s166
      %p175 = scmp.eq.s32.totalorder %s24, 0
      %p176 = por %p174, %p175
      %p177 = scmp.ne.s32.totalorder %s165, %s166
      %p178 = scmp.eq.s32.totalorder %s25, 1
      %p179 = por %p177, %p178
      %p181 = scmp.ne.s32.totalorder %s166, %s180
      %p182 = scmp.eq.s32.totalorder %s25, 0
      %p183 = por %p181, %p182
      %s185 = sadd.s32 %s184, 1
      %p188 = scmp.eq.s32.totalorder %s19, 1
      %p189 = scmp.ne.s32.totalorder %s184, %s186
      %p190 = scmp.eq.s32.totalorder %s19, 0
      %p191 = por %p189, %p190
      %p192 = scmp.ne.s32.totalorder %s184, %s186
      %p193 = scmp.eq.s32.totalorder %s24, 1
      %p194 = por %p192, %p193
      %p195 = scmp.ne.s32.totalorder %s186, %s187
      %p196 = scmp.eq.s32.totalorder %s24, 0
      %p197 = por %p195, %p196
      %p198 = scmp.ne.s32.totalorder %s186, %s187
      %p199 = scmp.eq.s32.totalorder %s25, 1
      %p200 = por %p198, %p199
      %p202 = scmp.ne.s32.totalorder %s187, %s201
      %p203 = scmp.eq.s32.totalorder %s25, 0
      %p204 = por %p202, %p203
      %s205 = ssub.s32 %s19, %s26
      %p206 = scmp.eq.s32.totalorder %s205, 0
      %s208 = sadd.s32 %s207, 1
      %s209 = scalar_select %p206, %s207, %s208
      %p212 = pneg %p206
      %p213 = scmp.eq.s32.totalorder %s19, 1
      %p214 = por %p212, %p213
      %p215 = scmp.ne.s32.totalorder %s207, %s210
      %p216 = scmp.eq.s32.totalorder %s19, 0
      %p217 = por %p215, %p216
      %p218 = scmp.ne.s32.totalorder %s207, %s210
      %p219 = scmp.eq.s32.totalorder %s24, 1
      %p220 = por %p218, %p219
      %p221 = scmp.ne.s32.totalorder %s210, %s211
      %p222 = scmp.eq.s32.totalorder %s24, 0
      %p223 = por %p221, %p222
      %p224 = scmp.ne.s32.totalorder %s210, %s211
      %p225 = scmp.eq.s32.totalorder %s25, 1
      %p226 = por %p224, %p225
      %p228 = scmp.ne.s32.totalorder %s211, %s227
      %p229 = scmp.eq.s32.totalorder %s25, 0
      %p230 = por %p228, %p229
      %p231 = scmp.le.s32.totalorder 1, %s19
      %p232 = scmp.lt.s32.totalorder %s19, 3
      %p233 = pnand %p231, %p232
      %p234 = pneg %p233
      // Predicated region
      $region9: #{tpu_custom_call.1} parent=5 // pred_check
        _
      $region10: #{tpu_custom_call.1} parent=5 // pred_check_branch
        %236 = sbr.rel (%p233) target = $region12
      $region11: #{tpu_custom_call.1} parent=5 // pred_region
        %s237 = ssub.s32 %s19, 1
        // Predicated region
        $region13: #{tpu_custom_call.1} parent=11 // pred_check
          %p238 = pneg %p92
        $region14: #{tpu_custom_call.1} parent=11 // pred_check_branch
          %240 = sbr.rel (%p238) target = $region16
        $region15: #{tpu_custom_call.1} parent=11 // pred_region
          %s242 = ssub.s32 16, 16
          %243 = vsyncadd [#allocation8], %s242
          %s245 = sshll.u32 %s2, 4
          %s246 = int_to_ptr.vmem [resolvable:$true] %s245
          %248 = dma.vmem_to_smem %s246, 16, [#allocation7], [#allocation8]
        $region16: #{tpu_custom_call.1} parent=11 // pred_fallthru
          _
        // Predicated region
        $region17: #{tpu_custom_call.1} parent=11 // pred_check
          %p249 = pneg %p113
        $region18: #{tpu_custom_call.1} parent=11 // pred_check_branch
          %251 = sbr.rel (%p249) target = $region20
        $region19: #{tpu_custom_call.1} parent=11 // pred_region
          _
        $region20: #{tpu_custom_call.1} parent=11 // pred_fallthru
          _
        // Predicated region
        $region21: #{tpu_custom_call.1} parent=11 // pred_check
          %p252 = pneg %p134
        $region22: #{tpu_custom_call.1} parent=11 // pred_check_branch
          %254 = sbr.rel (%p252) target = $region24
        $region23: #{tpu_custom_call.1} parent=11 // pred_region
          %s256 = ssub.s32 16, 16
          %257 = vsyncadd [#allocation10], %s256
          %s259 = sshll.u32 %s4, 4
          %s260 = int_to_ptr.vmem [resolvable:$true] %s259
          %262 = dma.vmem_to_smem %s260, 16, [#allocation9], [#allocation10]
        $region24: #{tpu_custom_call.1} parent=11 // pred_fallthru
          _
        // Predicated region
        $region25: #{tpu_custom_call.1} parent=11 // pred_check
          %p263 = pneg %p155
        $region26: #{tpu_custom_call.1} parent=11 // pred_check_branch
          %265 = sbr.rel (%p263) target = $region28
        $region27: #{tpu_custom_call.1} parent=11 // pred_region
          _
        $region28: #{tpu_custom_call.1} parent=11 // pred_fallthru
          _
        // Predicated region
        $region29: #{tpu_custom_call.1} parent=11 // pred_check
          %p266 = pneg %p176
        $region30: #{tpu_custom_call.1} parent=11 // pred_check_branch
          %268 = sbr.rel (%p266) target = $region32
        $region31: #{tpu_custom_call.1} parent=11 // pred_region
          %s270 = ssub.s32 16, 16
          %271 = vsyncadd [#allocation10], %s270
          %s273 = sshll.u32 %s6, 4
          %s274 = int_to_ptr.vmem [resolvable:$true] %s273
          %276 = dma.vmem_to_smem %s274, 16, [#allocation11], [#allocation10]
        $region32: #{tpu_custom_call.1} parent=11 // pred_fallthru
          _
        // Predicated region
        $region33: #{tpu_custom_call.1} parent=11 // pred_check
          %p277 = pneg %p197
        $region34: #{tpu_custom_call.1} parent=11 // pred_check_branch
          %279 = sbr.rel (%p277) target = $region36
        $region35: #{tpu_custom_call.1} parent=11 // pred_region
          _
        $region36: #{tpu_custom_call.1} parent=11 // pred_fallthru
          _
      $region12: #{tpu_custom_call.1} parent=5 // pred_fallthru
        _
      %p280 = scmp.lt.s32.totalorder %s19, 2
      // Predicated region
      $region37: #{tpu_custom_call.1} parent=5 // pred_check
        %p281 = pneg %p280
      $region38: #{tpu_custom_call.1} parent=5 // pred_check_branch
        %283 = sbr.rel (%p281) target = $region40
      $region39: #{tpu_custom_call.1} parent=5 // pred_region
        // Predicated region
        $region41: #{tpu_custom_call.1} parent=39 // pred_check
          %p284 = pneg %p39
        $region42: #{tpu_custom_call.1} parent=39 // pred_check_branch
          %286 = sbr.rel (%p284) target = $region44
        $region43: #{tpu_custom_call.1} parent=39 // pred_region
          %p287 = scmp.lt.s32.totalorder %s19, 1
          %s288 = scalar_select %p287, %s19, 1
          %s289 = smul.addr %s288, 2
          %s290 = smul.addr %s289, 8
          %s291 = scalar_lea.vmem %s0, %s290
        $region44: #{tpu_custom_call.1} parent=39 // pred_fallthru
          _
        // Predicated region
        $region45: #{tpu_custom_call.1} parent=39 // pred_check
          %p292 = pneg %p65
        $region46: #{tpu_custom_call.1} parent=39 // pred_check_branch
          %294 = sbr.rel (%p292) target = $region48
        $region47: #{tpu_custom_call.1} parent=39 // pred_region
          %p295 = scmp.lt.s32.totalorder %s19, 1
          %s296 = scalar_select %p295, %s19, 1
          %s297 = smul.addr %s296, 3
          %s298 = smul.addr %s297, 8
          %s299 = scalar_lea.vmem %s1, %s298
        $region48: #{tpu_custom_call.1} parent=39 // pred_fallthru
          _
      $region40: #{tpu_custom_call.1} parent=5 // pred_fallthru
        _
      %p300 = scmp.le.s32.totalorder 1, %s19
      %p301 = scmp.lt.s32.totalorder %s19, 3
      %p302 = pnand %p300, %p301
      %p303 = pneg %p302
      // Predicated region
      $region49: #{tpu_custom_call.1} parent=5 // pred_check
        _
      $region50: #{tpu_custom_call.1} parent=5 // pred_check_branch
        %305 = sbr.rel (%p302) target = $region52
      $region51: #{tpu_custom_call.1} parent=5 // pred_region
        %s306 = ssub.s32 %s19, 1
        // Predicated region
        $region53: #{tpu_custom_call.1} parent=51 // pred_check
          %p307 = pneg %p92
        $region54: #{tpu_custom_call.1} parent=51 // pred_check_branch
          %309 = sbr.rel (%p307) target = $region56
        $region55: #{tpu_custom_call.1} parent=51 // pred_region
          %310 = dma.done [#allocation8], 16
        $region56: #{tpu_custom_call.1} parent=51 // pred_fallthru
          _
        // Predicated region
        $region57: #{tpu_custom_call.1} parent=51 // pred_check
          %p311 = pneg %p134
        $region58: #{tpu_custom_call.1} parent=51 // pred_check_branch
          %313 = sbr.rel (%p311) target = $region60
        $region59: #{tpu_custom_call.1} parent=51 // pred_region
          %314 = dma.done [#allocation10], 16
        $region60: #{tpu_custom_call.1} parent=51 // pred_fallthru
          _
        // Predicated region
        $region61: #{tpu_custom_call.1} parent=51 // pred_check
          %p315 = pneg %p176
        $region62: #{tpu_custom_call.1} parent=51 // pred_check_branch
          %317 = sbr.rel (%p315) target = $region64
        $region63: #{tpu_custom_call.1} parent=51 // pred_region
          %318 = dma.done [#allocation10], 16
        $region64: #{tpu_custom_call.1} parent=51 // pred_fallthru
          _
        %319 = sfence
        %p320 = scmp.lt.s32.totalorder %s24, 1
        %s321 = scalar_select %p320, %s24, 1
        %s322 = smul.addr %s321, 2
        %s323 = smul.addr %s322, 8
        %s324 = scalar_lea.vmem %s0, %s323
        %p325 = pneg %p45
        %p326 = pneg %p42
        %p327 = scmp.lt.s32.totalorder %s24, 1
        %s328 = scalar_select %p327, %s24, 1
        %s329 = smul.addr %s328, 3
        %s330 = smul.addr %s329, 8
        %s331 = scalar_lea.vmem %s1, %s330
        %p332 = pneg %p71
        %p333 = pneg %p68
        %p334 = pneg %p92
        %p335 = pneg %p89
        %p336 = pneg %p113
        %p337 = pneg %p110
        %p338 = pneg %p134
        %p339 = pneg %p131
        %p340 = pneg %p155
        %p341 = pneg %p152
        %p342 = pneg %p176
        %p343 = pneg %p173
        %p344 = pneg %p197
        %p345 = pneg %p194
        %p346 = pneg %p223
        %p347 = pneg %p220
        %p348 = scmp.lt.s32.totalorder %s24, 1
        %s349 = scalar_select %p348, %s24, 1
        %s350 = smul.addr %s349, 2
        %s351 = smul.addr %s350, 8
        %s352 = scalar_lea.vmem %s8, %s351
        %p353 = scmp.lt.s32.totalorder %s24, 1
        %s354 = scalar_select %p353, %s24, 1
        %s355 = smul.addr %s354, 2
        %s356 = smul.addr %s355, 8
        %s357 = scalar_lea.vmem %s0, %s356
        %p358 = scmp.lt.s32.totalorder %s24, 1
        %s359 = scalar_select %p358, %s24, 1
        %s360 = smul.addr %s359, 3
        %s361 = smul.addr %s360, 8
        %s362 = scalar_lea.vmem %s1, %s361
        %p363 = scmp.lt.s32.totalorder %s24, 1
        %s364 = scalar_select %p363, %s24, 1
        %s365 = smul.addr %s364, 2
        %s366 = smul.addr %s365, 8
        %s367 = scalar_lea.vmem %s8, %s366
        %s368 = sld [smem:[#allocation7]]
        %s369 = sld [smem:[#allocation7 + $0x1]]
        %s370 = sld [smem:[#allocation7 + $0x2]]
        %s371 = sld [smem:[#allocation7 + $0x3]]
        %s372 = sld [smem:[#allocation7 + $0x4]]
        %s373 = sld [smem:[#allocation7 + $0x5]]
        %s374 = sld [smem:[#allocation7 + $0x6]]
        %s375 = sld [smem:[#allocation7 + $0x7]]
        %s376 = sld [smem:[#allocation9]]
        %s377 = sld [smem:[#allocation9 + $0x1]]
        %s378 = sld [smem:[#allocation9 + $0x2]]
        %s379 = sld [smem:[#allocation9 + $0x3]]
        %s380 = sld [smem:[#allocation9 + $0x4]]
        %s381 = sld [smem:[#allocation9 + $0x5]]
        %s382 = sld [smem:[#allocation9 + $0x6]]
        %s383 = sld [smem:[#allocation9 + $0x7]]
        %s384 = sld [smem:[#allocation9 + $0x8]]
        %s385 = sld [smem:[#allocation9 + $0x9]]
        %s386 = sld [smem:[#allocation9 + $0xa]]
        %s387 = sld [smem:[#allocation9 + $0xb]]
        %s388 = sld [smem:[#allocation9 + $0xc]]
        %s389 = sld [smem:[#allocation9 + $0xd]]
        %s390 = sld [smem:[#allocation9 + $0xe]]
        %s391 = sld [smem:[#allocation9 + $0xf]]
        %s392 = sld [smem:[#allocation9 + $0x10]]
        %s393 = sld [smem:[#allocation9 + $0x11]]
        %s394 = sld [smem:[#allocation11]]
        %s395 = sld [smem:[#allocation11 + $0x1]]
        %s396 = sld [smem:[#allocation11 + $0x2]]
        %s397 = sld [smem:[#allocation11 + $0x3]]
        %s398 = sld [smem:[#allocation11 + $0x4]]
        %s399 = sld [smem:[#allocation11 + $0x5]]
        %s400 = sld [smem:[#allocation11 + $0x6]]
        %s401 = sld [smem:[#allocation11 + $0x7]]
        %s402 = sld [smem:[#allocation11 + $0x8]]
        %v403 = vlaneseq
        %v404 = vshrl.u32 %v403, 7
        %v405 = vadd.s32 %v404, 8
        %v406 = vlaneseq
        %v407 = vand.u32 %v406, 127
        %v408 = vmul.u32 %v407, 2
        %vm409 = vcmp.eq.s32.totalorder %v404, %v408
        %vm410 = vcmp.eq.s32.totalorder %v405, %v408
        %v411 = vsel %vm409, 1, 0
        %v412 = vsel %vm410, 1, 0
        %v413 = vcvt.s32.f32 %v411
        %v414 = vcvt.s32.f32 %v412
        %v415 = vadd.s32 %v408, 1
        %vm416 = vcmp.eq.s32.totalorder %v404, %v415
        %vm417 = vcmp.eq.s32.totalorder %v405, %v415
        %v418 = vsel %vm416, 1, 0
        %v419 = vsel %vm417, 1, 0
        %v420 = vcvt.s32.f32 %v418
        %v421 = vcvt.s32.f32 %v419
        %v422 = vmul.u32 %v404, 2
        %vm423 = vcmp.eq.s32.totalorder %v407, %v422
        %v424 = vsel %vm423, 1, 0
        %v425 = vcvt.s32.f32 %v424
        %v426 = vadd.s32 %v422, 1
        %vm427 = vcmp.eq.s32.totalorder %v407, %v426
        %v428 = vsel %vm427, 1, 0
        %v429 = vcvt.s32.f32 %v428
        %v430 = vld [vmem:[%s357] sm:$0xff]
        %s431 = scalar_lea.vmem %s357, 8
        %v432 = vld [vmem:[%s431] sm:$0xff]
        %v433 = vstv %s368
        %v434 = vmul.f32 %v430, %v433
        %v435 = vadd.f32 %v434, 0.0
        %v436 = vstv %s372
        %v437 = vmul.f32 %v432, %v436
        %v438 = vadd.f32 %v435, %v437
        %v439 = vstv %s369
        %v440 = vmul.f32 %v430, %v439
        %v441 = vadd.f32 %v440, 0.0
        %v442 = vstv %s373
        %v443 = vmul.f32 %v432, %v442
        %v444 = vadd.f32 %v441, %v443
        %vm445 = vcmask 64512
        %v447 = vsel %vm445, %v444, 0
        %449 = vmatprep.subr.mxu0 0.0
        %450 = vmatpush1.msra.mxu0 %v429
        %451 = vmatprep.subr.mxu0 0.0
        %452 = vmatpush1.msra.mxu0 0.0
        %453 = vmatprep.subr.mxu0 0.0
        %454 = vmatpush1.msra.mxu0 0.0
        %455 = vmatprep.subr.mxu0 0.0
        %456 = vmatpush1.msra.mxu0 0.0
        %457 = vmatprep.subr.mxu0 0.0
        %458 = vmatpush1.msra.mxu0 0.0
        %459 = vmatprep.subr.mxu0 0.0
        %460 = vmatpush1.msra.mxu0 0.0
        %461 = vmatprep.subr.mxu0 0.0
        %462 = vmatpush1.msra.mxu0 0.0
        %463 = vmatprep.subr.mxu0 0.0
        %464 = vmatpush1.msra.mxu0 0.0
        %465 = vmatprep.subr.mxu0 0.0
        %466 = vmatpush1.msra.mxu0 0.0
        %467 = vmatprep.subr.mxu0 0.0
        %468 = vmatpush1.msra.mxu0 0.0
        %469 = vmatprep.subr.mxu0 0.0
        %470 = vmatpush1.msra.mxu0 0.0
        %471 = vmatprep.subr.mxu0 0.0
        %472 = vmatpush1.msra.mxu0 0.0
        %473 = vmatprep.subr.mxu0 0.0
        %474 = vmatpush1.msra.mxu0 0.0
        %475 = vmatprep.subr.mxu0 0.0
        %476 = vmatpush1.msra.mxu0 0.0
        %477 = vmatprep.subr.mxu0 0.0
        %478 = vmatpush1.msra.mxu0 0.0
        %479 = vmatprep.subr.mxu0 0.0
        %480 = vmatpush1.msra.mxu0 0.0
        %481 = vmatprep.subr.mxu0 0.0
        %482 = vmatpush1.msra.mxu0 0.0
        %483 = vmatprep.subr.mxu0 0.0
        %484 = vmatpush1.msra.mxu0 0.0
        %485 = vmatprep.subr.mxu0 0.0
        %486 = vmatpush1.msra.mxu0 0.0
        %487 = vmatprep.subr.mxu0 0.0
        %488 = vmatpush1.msra.mxu0 0.0
        %489 = vmatprep.subr.mxu0 0.0
        %490 = vmatpush1.msra.mxu0 0.0
        %491 = vmatprep.subr.mxu0 0.0
        %492 = vmatpush1.msra.mxu0 0.0
        %493 = vmatprep.subr.mxu0 0.0
        %494 = vmatpush1.msra.mxu0 0.0
        %495 = vmatprep.subr.mxu0 0.0
        %496 = vmatpush1.msra.mxu0 0.0
        %497 = vmatprep.subr.mxu0 0.0
        %498 = vmatpush1.msra.mxu0 0.0
        %499 = vmatprep.subr.mxu0 0.0
        %500 = vmatpush1.msra.mxu0 0.0
        %501 = vmatprep.subr.mxu0 0.0
        %502 = vmatpush1.msra.mxu0 0.0
        %503 = vmatprep.subr.mxu0 0.0
        %504 = vmatpush1.msra.mxu0 0.0
        %505 = vmatprep.subr.mxu0 0.0
        %506 = vmatpush1.msra.mxu0 0.0
        %507 = vmatprep.subr.mxu0 0.0
        %508 = vmatpush1.msra.mxu0 0.0
        %509 = vmatprep.subr.mxu0 0.0
        %510 = vmatpush1.msra.mxu0 0.0
        %511 = vmatprep.subr.mxu0 0.0
        %512 = vmatpush1.msra.mxu0 0.0
        %513 = vmatprep.mubr.f32.mxu0 0.0
        %514 = vmatmul.mubr.f32.gmra.mrb[0].mxu0 %v447
        %v515 = vpop.f32.mrb[0].mxu0
        %v516 = vadd.f32 0.0, %v515
        %v517 = vpop.f32.mrb[0].mxu0
        %518 = vdwg.mxu0
        %v520 = vsel %vm445, %v438, 0
        %522 = vmatprep.subr.mxu0 0.0
        %523 = vmatpush1.msra.mxu0 %v425
        %524 = vmatprep.subr.mxu0 0.0
        %525 = vmatpush1.msra.mxu0 0.0
        %526 = vmatprep.subr.mxu0 0.0
        %527 = vmatpush1.msra.mxu0 0.0
        %528 = vmatprep.subr.mxu0 0.0
        %529 = vmatpush1.msra.mxu0 0.0
        %530 = vmatprep.subr.mxu0 0.0
        %531 = vmatpush1.msra.mxu0 0.0
        %532 = vmatprep.subr.mxu0 0.0
        %533 = vmatpush1.msra.mxu0 0.0
        %534 = vmatprep.subr.mxu0 0.0
        %535 = vmatpush1.msra.mxu0 0.0
        %536 = vmatprep.subr.mxu0 0.0
        %537 = vmatpush1.msra.mxu0 0.0
        %538 = vmatprep.subr.mxu0 0.0
        %539 = vmatpush1.msra.mxu0 0.0
        %540 = vmatprep.subr.mxu0 0.0
        %541 = vmatpush1.msra.mxu0 0.0
        %542 = vmatprep.subr.mxu0 0.0
        %543 = vmatpush1.msra.mxu0 0.0
        %544 = vmatprep.subr.mxu0 0.0
        %545 = vmatpush1.msra.mxu0 0.0
        %546 = vmatprep.subr.mxu0 0.0
        %547 = vmatpush1.msra.mxu0 0.0
        %548 = vmatprep.subr.mxu0 0.0
        %549 = vmatpush1.msra.mxu0 0.0
        %550 = vmatprep.subr.mxu0 0.0
        %551 = vmatpush1.msra.mxu0 0.0
        %552 = vmatprep.subr.mxu0 0.0
        %553 = vmatpush1.msra.mxu0 0.0
        %554 = vmatprep.subr.mxu0 0.0
        %555 = vmatpush1.msra.mxu0 0.0
        %556 = vmatprep.subr.mxu0 0.0
        %557 = vmatpush1.msra.mxu0 0.0
        %558 = vmatprep.subr.mxu0 0.0
        %559 = vmatpush1.msra.mxu0 0.0
        %560 = vmatprep.subr.mxu0 0.0
        %561 = vmatpush1.msra.mxu0 0.0
        %562 = vmatprep.subr.mxu0 0.0
        %563 = vmatpush1.msra.mxu0 0.0
        %564 = vmatprep.subr.mxu0 0.0
        %565 = vmatpush1.msra.mxu0 0.0
        %566 = vmatprep.subr.mxu0 0.0
        %567 = vmatpush1.msra.mxu0 0.0
        %568 = vmatprep.subr.mxu0 0.0
        %569 = vmatpush1.msra.mxu0 0.0
        %570 = vmatprep.subr.mxu0 0.0
        %571 = vmatpush1.msra.mxu0 0.0
        %572 = vmatprep.subr.mxu0 0.0
        %573 = vmatpush1.msra.mxu0 0.0
        %574 = vmatprep.subr.mxu0 0.0
        %575 = vmatpush1.msra.mxu0 0.0
        %576 = vmatprep.subr.mxu0 0.0
        %577 = vmatpush1.msra.mxu0 0.0
        %578 = vmatprep.subr.mxu0 0.0
        %579 = vmatpush1.msra.mxu0 0.0
        %580 = vmatprep.subr.mxu0 0.0
        %581 = vmatpush1.msra.mxu0 0.0
        %582 = vmatprep.subr.mxu0 0.0
        %583 = vmatpush1.msra.mxu0 0.0
        %584 = vmatprep.subr.mxu0 0.0
        %585 = vmatpush1.msra.mxu0 0.0
        %586 = vmatprep.mubr.f32.mxu0 0.0
        %587 = vmatmul.mubr.f32.gmra.mrb[0].mxu0 %v520
        %v588 = vpop.f32.mrb[0].mxu0
        %v589 = vadd.f32 %v516, %v588
        %v590 = vpop.f32.mrb[0].mxu0
        %591 = vdwg.mxu0
        %v592 = vstv %s370
        %v593 = vmul.f32 %v430, %v592
        %v594 = vadd.f32 %v593, 0.0
        %v595 = vstv %s374
        %v596 = vmul.f32 %v432, %v595
        %v597 = vadd.f32 %v594, %v596
        %v598 = vstv %s371
        %v599 = vmul.f32 %v430, %v598
        %v600 = vadd.f32 %v599, 0.0
        %v601 = vstv %s375
        %v602 = vmul.f32 %v432, %v601
        %v603 = vadd.f32 %v600, %v602
        %v605 = vsel %vm445, %v603, 0
        %607 = vmatprep.subr.mxu0 0.0
        %608 = vmatpush1.msra.mxu0 %v429
        %609 = vmatprep.subr.mxu0 0.0
        %610 = vmatpush1.msra.mxu0 0.0
        %611 = vmatprep.subr.mxu0 0.0
        %612 = vmatpush1.msra.mxu0 0.0
        %613 = vmatprep.subr.mxu0 0.0
        %614 = vmatpush1.msra.mxu0 0.0
        %615 = vmatprep.subr.mxu0 0.0
        %616 = vmatpush1.msra.mxu0 0.0
        %617 = vmatprep.subr.mxu0 0.0
        %618 = vmatpush1.msra.mxu0 0.0
        %619 = vmatprep.subr.mxu0 0.0
        %620 = vmatpush1.msra.mxu0 0.0
        %621 = vmatprep.subr.mxu0 0.0
        %622 = vmatpush1.msra.mxu0 0.0
        %623 = vmatprep.subr.mxu0 0.0
        %624 = vmatpush1.msra.mxu0 0.0
        %625 = vmatprep.subr.mxu0 0.0
        %626 = vmatpush1.msra.mxu0 0.0
        %627 = vmatprep.subr.mxu0 0.0
        %628 = vmatpush1.msra.mxu0 0.0
        %629 = vmatprep.subr.mxu0 0.0
        %630 = vmatpush1.msra.mxu0 0.0
        %631 = vmatprep.subr.mxu0 0.0
        %632 = vmatpush1.msra.mxu0 0.0
        %633 = vmatprep.subr.mxu0 0.0
        %634 = vmatpush1.msra.mxu0 0.0
        %635 = vmatprep.subr.mxu0 0.0
        %636 = vmatpush1.msra.mxu0 0.0
        %637 = vmatprep.subr.mxu0 0.0
        %638 = vmatpush1.msra.mxu0 0.0
        %639 = vmatprep.subr.mxu0 0.0
        %640 = vmatpush1.msra.mxu0 0.0
        %641 = vmatprep.subr.mxu0 0.0
        %642 = vmatpush1.msra.mxu0 0.0
        %643 = vmatprep.subr.mxu0 0.0
        %644 = vmatpush1.msra.mxu0 0.0
        %645 = vmatprep.subr.mxu0 0.0
        %646 = vmatpush1.msra.mxu0 0.0
        %647 = vmatprep.subr.mxu0 0.0
        %648 = vmatpush1.msra.mxu0 0.0
        %649 = vmatprep.subr.mxu0 0.0
        %650 = vmatpush1.msra.mxu0 0.0
        %651 = vmatprep.subr.mxu0 0.0
        %652 = vmatpush1.msra.mxu0 0.0
        %653 = vmatprep.subr.mxu0 0.0
        %654 = vmatpush1.msra.mxu0 0.0
        %655 = vmatprep.subr.mxu0 0.0
        %656 = vmatpush1.msra.mxu0 0.0
        %657 = vmatprep.subr.mxu0 0.0
        %658 = vmatpush1.msra.mxu0 0.0
        %659 = vmatprep.subr.mxu0 0.0
        %660 = vmatpush1.msra.mxu0 0.0
        %661 = vmatprep.subr.mxu0 0.0
        %662 = vmatpush1.msra.mxu0 0.0
        %663 = vmatprep.subr.mxu0 0.0
        %664 = vmatpush1.msra.mxu0 0.0
        %665 = vmatprep.subr.mxu0 0.0
        %666 = vmatpush1.msra.mxu0 0.0
        %667 = vmatprep.subr.mxu0 0.0
        %668 = vmatpush1.msra.mxu0 0.0
        %669 = vmatprep.subr.mxu0 0.0
        %670 = vmatpush1.msra.mxu0 0.0
        %671 = vmatprep.mubr.f32.mxu0 0.0
        %672 = vmatmul.mubr.f32.gmra.mrb[0].mxu0 %v605
        %v673 = vpop.f32.mrb[0].mxu0
        %v674 = vadd.f32 0.0, %v673
        %v675 = vpop.f32.mrb[0].mxu0
        %676 = vdwg.mxu0
        %v678 = vsel %vm445, %v597, 0
        %680 = vmatprep.subr.mxu0 0.0
        %681 = vmatpush1.msra.mxu0 %v425
        %682 = vmatprep.subr.mxu0 0.0
        %683 = vmatpush1.msra.mxu0 0.0
        %684 = vmatprep.subr.mxu0 0.0
        %685 = vmatpush1.msra.mxu0 0.0
        %686 = vmatprep.subr.mxu0 0.0
        %687 = vmatpush1.msra.mxu0 0.0
        %688 = vmatprep.subr.mxu0 0.0
        %689 = vmatpush1.msra.mxu0 0.0
        %690 = vmatprep.subr.mxu0 0.0
        %691 = vmatpush1.msra.mxu0 0.0
        %692 = vmatprep.subr.mxu0 0.0
        %693 = vmatpush1.msra.mxu0 0.0
        %694 = vmatprep.subr.mxu0 0.0
        %695 = vmatpush1.msra.mxu0 0.0
        %696 = vmatprep.subr.mxu0 0.0
        %697 = vmatpush1.msra.mxu0 0.0
        %698 = vmatprep.subr.mxu0 0.0
        %699 = vmatpush1.msra.mxu0 0.0
        %700 = vmatprep.subr.mxu0 0.0
        %701 = vmatpush1.msra.mxu0 0.0
        %702 = vmatprep.subr.mxu0 0.0
        %703 = vmatpush1.msra.mxu0 0.0
        %704 = vmatprep.subr.mxu0 0.0
        %705 = vmatpush1.msra.mxu0 0.0
        %706 = vmatprep.subr.mxu0 0.0
        %707 = vmatpush1.msra.mxu0 0.0
        %708 = vmatprep.subr.mxu0 0.0
        %709 = vmatpush1.msra.mxu0 0.0
        %710 = vmatprep.subr.mxu0 0.0
        %711 = vmatpush1.msra.mxu0 0.0
        %712 = vmatprep.subr.mxu0 0.0
        %713 = vmatpush1.msra.mxu0 0.0
        %714 = vmatprep.subr.mxu0 0.0
        %715 = vmatpush1.msra.mxu0 0.0
        %716 = vmatprep.subr.mxu0 0.0
        %717 = vmatpush1.msra.mxu0 0.0
        %718 = vmatprep.subr.mxu0 0.0
        %719 = vmatpush1.msra.mxu0 0.0
        %720 = vmatprep.subr.mxu0 0.0
        %721 = vmatpush1.msra.mxu0 0.0
        %722 = vmatprep.subr.mxu0 0.0
        %723 = vmatpush1.msra.mxu0 0.0
        %724 = vmatprep.subr.mxu0 0.0
        %725 = vmatpush1.msra.mxu0 0.0
        %726 = vmatprep.subr.mxu0 0.0
        %727 = vmatpush1.msra.mxu0 0.0
        %728 = vmatprep.subr.mxu0 0.0
        %729 = vmatpush1.msra.mxu0 0.0
        %730 = vmatprep.subr.mxu0 0.0
        %731 = vmatpush1.msra.mxu0 0.0
        %732 = vmatprep.subr.mxu0 0.0
        %733 = vmatpush1.msra.mxu0 0.0
        %734 = vmatprep.subr.mxu0 0.0
        %735 = vmatpush1.msra.mxu0 0.0
        %736 = vmatprep.subr.mxu0 0.0
        %737 = vmatpush1.msra.mxu0 0.0
        %738 = vmatprep.subr.mxu0 0.0
        %739 = vmatpush1.msra.mxu0 0.0
        %740 = vmatprep.subr.mxu0 0.0
        %741 = vmatpush1.msra.mxu0 0.0
        %742 = vmatprep.subr.mxu0 0.0
        %743 = vmatpush1.msra.mxu0 0.0
        %744 = vmatprep.mubr.f32.mxu0 0.0
        %745 = vmatmul.mubr.f32.gmra.mrb[0].mxu0 %v678
        %v746 = vpop.f32.mrb[0].mxu0
        %v747 = vadd.f32 %v674, %v746
        %v748 = vpop.f32.mrb[0].mxu0
        %749 = vdwg.mxu0
        %v751 = vsel %vm445, %v420, 0
        %v754 = vsel %vm445, %v421, 0
        %756 = vmatprep.subr.mxu0 0.0
        %757 = vmatpush1.msra.mxu0 %v747
        %758 = vmatprep.subr.mxu0 0.0
        %759 = vmatpush1.msra.mxu0 0.0
        %760 = vmatprep.subr.mxu0 0.0
        %761 = vmatpush1.msra.mxu0 0.0
        %762 = vmatprep.subr.mxu0 0.0
        %763 = vmatpush1.msra.mxu0 0.0
        %764 = vmatprep.subr.mxu0 0.0
        %765 = vmatpush1.msra.mxu0 0.0
        %766 = vmatprep.subr.mxu0 0.0
        %767 = vmatpush1.msra.mxu0 0.0
        %768 = vmatprep.subr.mxu0 0.0
        %769 = vmatpush1.msra.mxu0 0.0
        %770 = vmatprep.subr.mxu0 0.0
        %771 = vmatpush1.msra.mxu0 0.0
        %772 = vmatprep.subr.mxu0 0.0
        %773 = vmatpush1.msra.mxu0 0.0
        %774 = vmatprep.subr.mxu0 0.0
        %775 = vmatpush1.msra.mxu0 0.0
        %776 = vmatprep.subr.mxu0 0.0
        %777 = vmatpush1.msra.mxu0 0.0
        %778 = vmatprep.subr.mxu0 0.0
        %779 = vmatpush1.msra.mxu0 0.0
        %780 = vmatprep.subr.mxu0 0.0
        %781 = vmatpush1.msra.mxu0 0.0
        %782 = vmatprep.subr.mxu0 0.0
        %783 = vmatpush1.msra.mxu0 0.0
        %784 = vmatprep.subr.mxu0 0.0
        %785 = vmatpush1.msra.mxu0 0.0
        %786 = vmatprep.subr.mxu0 0.0
        %787 = vmatpush1.msra.mxu0 0.0
        %788 = vmatprep.subr.mxu0 0.0
        %789 = vmatpush1.msra.mxu0 0.0
        %790 = vmatprep.subr.mxu0 0.0
        %791 = vmatpush1.msra.mxu0 0.0
        %792 = vmatprep.subr.mxu0 0.0
        %793 = vmatpush1.msra.mxu0 0.0
        %794 = vmatprep.subr.mxu0 0.0
        %795 = vmatpush1.msra.mxu0 0.0
        %796 = vmatprep.subr.mxu0 0.0
        %797 = vmatpush1.msra.mxu0 0.0
        %798 = vmatprep.subr.mxu0 0.0
        %799 = vmatpush1.msra.mxu0 0.0
        %800 = vmatprep.subr.mxu0 0.0
        %801 = vmatpush1.msra.mxu0 0.0
        %802 = vmatprep.subr.mxu0 0.0
        %803 = vmatpush1.msra.mxu0 0.0
        %804 = vmatprep.subr.mxu0 0.0
        %805 = vmatpush1.msra.mxu0 0.0
        %806 = vmatprep.subr.mxu0 0.0
        %807 = vmatpush1.msra.mxu0 0.0
        %808 = vmatprep.subr.mxu0 0.0
        %809 = vmatpush1.msra.mxu0 0.0
        %810 = vmatprep.subr.mxu0 0.0
        %811 = vmatpush1.msra.mxu0 0.0
        %812 = vmatprep.subr.mxu0 0.0
        %813 = vmatpush1.msra.mxu0 0.0
        %814 = vmatprep.subr.mxu0 0.0
        %815 = vmatpush1.msra.mxu0 0.0
        %816 = vmatprep.subr.mxu0 0.0
        %817 = vmatpush1.msra.mxu0 0.0
        %818 = vmatprep.subr.mxu0 0.0
        %819 = vmatpush1.msra.mxu0 0.0
        %820 = vmatprep.mubr.f32.mxu0 0.0
        %821 = vmatmul.mubr.f32.gmra.mrb[0].mxu0 %v751
        %v822 = vpop.f32.mrb[0].mxu0
        %v823 = vadd.f32 0.0, %v822
        %v824 = vpop.f32.mrb[0].mxu0
        %825 = vmatprep.mubr.f32.mxu0 0.0
        %826 = vmatmul.mubr.f32.gmra.mrb[0].mxu0 %v754
        %v827 = vpop.f32.mrb[0].mxu0
        %v828 = vadd.f32 0.0, %v827
        %v829 = vpop.f32.mrb[0].mxu0
        %830 = vdwg.mxu0
        %v832 = vsel %vm445, %v413, 0
        %v835 = vsel %vm445, %v414, 0
        %837 = vmatprep.subr.mxu0 0.0
        %838 = vmatpush1.msra.mxu0 %v589
        %839 = vmatprep.subr.mxu0 0.0
        %840 = vmatpush1.msra.mxu0 0.0
        %841 = vmatprep.subr.mxu0 0.0
        %842 = vmatpush1.msra.mxu0 0.0
        %843 = vmatprep.subr.mxu0 0.0
        %844 = vmatpush1.msra.mxu0 0.0
        %845 = vmatprep.subr.mxu0 0.0
        %846 = vmatpush1.msra.mxu0 0.0
        %847 = vmatprep.subr.mxu0 0.0
        %848 = vmatpush1.msra.mxu0 0.0
        %849 = vmatprep.subr.mxu0 0.0
        %850 = vmatpush1.msra.mxu0 0.0
        %851 = vmatprep.subr.mxu0 0.0
        %852 = vmatpush1.msra.mxu0 0.0
        %853 = vmatprep.subr.mxu0 0.0
        %854 = vmatpush1.msra.mxu0 0.0
        %855 = vmatprep.subr.mxu0 0.0
        %856 = vmatpush1.msra.mxu0 0.0
        %857 = vmatprep.subr.mxu0 0.0
        %858 = vmatpush1.msra.mxu0 0.0
        %859 = vmatprep.subr.mxu0 0.0
        %860 = vmatpush1.msra.mxu0 0.0
        %861 = vmatprep.subr.mxu0 0.0
        %862 = vmatpush1.msra.mxu0 0.0
        %863 = vmatprep.subr.mxu0 0.0
        %864 = vmatpush1.msra.mxu0 0.0
        %865 = vmatprep.subr.mxu0 0.0
        %866 = vmatpush1.msra.mxu0 0.0
        %867 = vmatprep.subr.mxu0 0.0
        %868 = vmatpush1.msra.mxu0 0.0
        %869 = vmatprep.subr.mxu0 0.0
        %870 = vmatpush1.msra.mxu0 0.0
        %871 = vmatprep.subr.mxu0 0.0
        %872 = vmatpush1.msra.mxu0 0.0
        %873 = vmatprep.subr.mxu0 0.0
        %874 = vmatpush1.msra.mxu0 0.0
        %875 = vmatprep.subr.mxu0 0.0
        %876 = vmatpush1.msra.mxu0 0.0
        %877 = vmatprep.subr.mxu0 0.0
        %878 = vmatpush1.msra.mxu0 0.0
        %879 = vmatprep.subr.mxu0 0.0
        %880 = vmatpush1.msra.mxu0 0.0
        %881 = vmatprep.subr.mxu0 0.0
        %882 = vmatpush1.msra.mxu0 0.0
        %883 = vmatprep.subr.mxu0 0.0
        %884 = vmatpush1.msra.mxu0 0.0
        %885 = vmatprep.subr.mxu0 0.0
        %886 = vmatpush1.msra.mxu0 0.0
        %887 = vmatprep.subr.mxu0 0.0
        %888 = vmatpush1.msra.mxu0 0.0
        %889 = vmatprep.subr.mxu0 0.0
        %890 = vmatpush1.msra.mxu0 0.0
        %891 = vmatprep.subr.mxu0 0.0
        %892 = vmatpush1.msra.mxu0 0.0
        %893 = vmatprep.subr.mxu0 0.0
        %894 = vmatpush1.msra.mxu0 0.0
        %895 = vmatprep.subr.mxu0 0.0
        %896 = vmatpush1.msra.mxu0 0.0
        %897 = vmatprep.subr.mxu0 0.0
        %898 = vmatpush1.msra.mxu0 0.0
        %899 = vmatprep.subr.mxu0 0.0
        %900 = vmatpush1.msra.mxu0 0.0
        %901 = vmatprep.mubr.f32.mxu0 0.0
        %902 = vmatmul.mubr.f32.gmra.mrb[0].mxu0 %v832
        %v903 = vpop.f32.mrb[0].mxu0
        %v904 = vadd.f32 %v823, %v903
        %v905 = vpop.f32.mrb[0].mxu0
        %906 = vmatprep.mubr.f32.mxu0 0.0
        %907 = vmatmul.mubr.f32.gmra.mrb[0].mxu0 %v835
        %v908 = vpop.f32.mrb[0].mxu0
        %v909 = vadd.f32 %v828, %v908
        %v910 = vpop.f32.mrb[0].mxu0
        %911 = vdwg.mxu0
        %s912 = sld [smem:[#allocation4]]
        %v913 = vstv %s912
        %v914 = vadd.f32 %v904, %v913
        %v915 = vadd.f32 %v909, %v913
        %vm916 = vcmask 130048
        %917 = vst.msk [vmem:[#allocation2] sm:$0xff] %vm916, %v914
        %918 = vst.msk [vmem:[#allocation2 + $0x8] sm:$0xff] %vm916, %v915
        %v919 = vld [vmem:[%s362 + $0x2] sm:$0xff]
        %v920 = vld [vmem:[%s362 + $0xa] sm:$0xff]
        %923 = vrot.lane.b32.xlu0 %v919, 126
        %v924 = vpop.permute.xlu0 %923
        %925 = vrot.lane.b32.xlu0 %v920, 126
        %v926 = vpop.permute.xlu0 %925
        %s929 = scalar_lea.vmem [#allocation2], 16
        %930 = vst.msk [vmem:[%s929] sm:$0xff] %vm916, %v924
        %931 = vst.msk [vmem:[%s929 + $0x8] sm:$0xff] %vm916, %v926
        %v932 = vld [vmem:[#allocation2] sm:$0xff]
        %v933 = vld [vmem:[#allocation2 + $0x8] sm:$0x3f]
        %v934 = vstv %s376
        %v935 = vmul.f32 %v932, %v934
        %v936 = vmul.f32 %v933, %v934
        %v937 = vadd.f32 %v935, 0.0
        %v938 = vadd.f32 %v936, 0.0
        %v939 = vstv %s377
        %v940 = vmul.f32 %v932, %v939
        %v941 = vmul.f32 %v933, %v939
        %944 = vrot.lane.b32.xlu0 %v940, 127
        %v945 = vpop.permute.xlu0 %944
        %946 = vrot.lane.b32.xlu0 %v941, 127
        %v947 = vpop.permute.xlu0 %946
        %v950 = vadd.f32 %v937, %v945
        %v951 = vadd.f32 %v938, %v947
        %v952 = vstv %s378
        %v953 = vmul.f32 %v932, %v952
        %v954 = vmul.f32 %v933, %v952
        %957 = vrot.lane.b32.xlu0 %v953, 126
        %v958 = vpop.permute.xlu0 %957
        %959 = vrot.lane.b32.xlu0 %v954, 126
        %v960 = vpop.permute.xlu0 %959
        %v963 = vadd.f32 %v950, %v958
        %v964 = vadd.f32 %v951, %v960
        %v965 = vld [vmem:[#allocation2 + $0x1] sm:$0xff]
        %v966 = vld [vmem:[#allocation2 + $0x9] sm:$0x3f]
        %v967 = vstv %s379
        %v968 = vmul.f32 %v965, %v967
        %v969 = vmul.f32 %v966, %v967
        %v970 = vadd.f32 %v963, %v968
        %v971 = vadd.f32 %v964, %v969
        %v972 = vstv %s380
        %v973 = vmul.f32 %v965, %v972
        %v974 = vmul.f32 %v966, %v972
        %977 = vrot.lane.b32.xlu0 %v973, 127
        %v978 = vpop.permute.xlu0 %977
        %979 = vrot.lane.b32.xlu0 %v974, 127
        %v980 = vpop.permute.xlu0 %979
        %v983 = vadd.f32 %v970, %v978
        %v984 = vadd.f32 %v971, %v980
        %v985 = vstv %s381
        %v986 = vmul.f32 %v965, %v985
        %v987 = vmul.f32 %v966, %v985
        %990 = vrot.lane.b32.xlu0 %v986, 126
        %v991 = vpop.permute.xlu0 %990
        %992 = vrot.lane.b32.xlu0 %v987, 126
        %v993 = vpop.permute.xlu0 %992
        %v996 = vadd.f32 %v983, %v991
        %v997 = vadd.f32 %v984, %v993
        %v998 = vld [vmem:[#allocation2 + $0x2] sm:$0xff]
        %v999 = vld [vmem:[#allocation2 + $0xa] sm:$0x3f]
        %v1000 = vstv %s382
        %v1001 = vmul.f32 %v998, %v1000
        %v1002 = vmul.f32 %v999, %v1000
        %v1003 = vadd.f32 %v996, %v1001
        %v1004 = vadd.f32 %v997, %v1002
        %v1005 = vstv %s383
        %v1006 = vmul.f32 %v998, %v1005
        %v1007 = vmul.f32 %v999, %v1005
        %1010 = vrot.lane.b32.xlu0 %v1006, 127
        %v1011 = vpop.permute.xlu0 %1010
        %1012 = vrot.lane.b32.xlu0 %v1007, 127
        %v1013 = vpop.permute.xlu0 %1012
        %v1016 = vadd.f32 %v1003, %v1011
        %v1017 = vadd.f32 %v1004, %v1013
        %v1018 = vstv %s384
        %v1019 = vmul.f32 %v998, %v1018
        %v1020 = vmul.f32 %v999, %v1018
        %1023 = vrot.lane.b32.xlu0 %v1019, 126
        %v1024 = vpop.permute.xlu0 %1023
        %1025 = vrot.lane.b32.xlu0 %v1020, 126
        %v1026 = vpop.permute.xlu0 %1025
        %v1029 = vadd.f32 %v1016, %v1024
        %v1030 = vadd.f32 %v1017, %v1026
        %v1031 = vld [vmem:[%s929] sm:$0xff]
        %v1032 = vld [vmem:[%s929 + $0x8] sm:$0x3f]
        %v1033 = vstv %s385
        %v1034 = vmul.f32 %v1031, %v1033
        %v1035 = vmul.f32 %v1032, %v1033
        %v1036 = vadd.f32 %v1029, %v1034
        %v1037 = vadd.f32 %v1030, %v1035
        %v1038 = vstv %s386
        %v1039 = vmul.f32 %v1031, %v1038
        %v1040 = vmul.f32 %v1032, %v1038
        %1043 = vrot.lane.b32.xlu0 %v1039, 127
        %v1044 = vpop.permute.xlu0 %1043
        %1045 = vrot.lane.b32.xlu0 %v1040, 127
        %v1046 = vpop.permute.xlu0 %1045
        %v1049 = vadd.f32 %v1036, %v1044
        %v1050 = vadd.f32 %v1037, %v1046
        %v1051 = vstv %s387
        %v1052 = vmul.f32 %v1031, %v1051
        %v1053 = vmul.f32 %v1032, %v1051
        %1056 = vrot.lane.b32.xlu0 %v1052, 126
        %v1057 = vpop.permute.xlu0 %1056
        %1058 = vrot.lane.b32.xlu0 %v1053, 126
        %v1059 = vpop.permute.xlu0 %1058
        %v1062 = vadd.f32 %v1049, %v1057
        %v1063 = vadd.f32 %v1050, %v1059
        %v1064 = vld [vmem:[%s929 + $0x1] sm:$0xff]
        %v1065 = vld [vmem:[%s929 + $0x9] sm:$0x3f]
        %v1066 = vstv %s388
        %v1067 = vmul.f32 %v1064, %v1066
        %v1068 = vmul.f32 %v1065, %v1066
        %v1069 = vadd.f32 %v1062, %v1067
        %v1070 = vadd.f32 %v1063, %v1068
        %v1071 = vstv %s389
        %v1072 = vmul.f32 %v1064, %v1071
        %v1073 = vmul.f32 %v1065, %v1071
        %1076 = vrot.lane.b32.xlu0 %v1072, 127
        %v1077 = vpop.permute.xlu0 %1076
        %1078 = vrot.lane.b32.xlu0 %v1073, 127
        %v1079 = vpop.permute.xlu0 %1078
        %v1082 = vadd.f32 %v1069, %v1077
        %v1083 = vadd.f32 %v1070, %v1079
        %v1084 = vstv %s390
        %v1085 = vmul.f32 %v1064, %v1084
        %v1086 = vmul.f32 %v1065, %v1084
        %1089 = vrot.lane.b32.xlu0 %v1085, 126
        %v1090 = vpop.permute.xlu0 %1089
        %1091 = vrot.lane.b32.xlu0 %v1086, 126
        %v1092 = vpop.permute.xlu0 %1091
        %v1095 = vadd.f32 %v1082, %v1090
        %v1096 = vadd.f32 %v1083, %v1092
        %v1097 = vld [vmem:[%s929 + $0x2] sm:$0xff]
        %v1098 = vld [vmem:[%s929 + $0xa] sm:$0x3f]
        %v1099 = vstv %s391
        %v1100 = vmul.f32 %v1097, %v1099
        %v1101 = vmul.f32 %v1098, %v1099
        %v1102 = vadd.f32 %v1095, %v1100
        %v1103 = vadd.f32 %v1096, %v1101
        %v1104 = vstv %s392
        %v1105 = vmul.f32 %v1097, %v1104
        %v1106 = vmul.f32 %v1098, %v1104
        %1109 = vrot.lane.b32.xlu0 %v1105, 127
        %v1110 = vpop.permute.xlu0 %1109
        %1111 = vrot.lane.b32.xlu0 %v1106, 127
        %v1112 = vpop.permute.xlu0 %1111
        %v1115 = vadd.f32 %v1102, %v1110
        %v1116 = vadd.f32 %v1103, %v1112
        %v1117 = vstv %s393
        %v1118 = vmul.f32 %v1097, %v1117
        %v1119 = vmul.f32 %v1098, %v1117
        %1122 = vrot.lane.b32.xlu0 %v1118, 126
        %v1123 = vpop.permute.xlu0 %1122
        %1124 = vrot.lane.b32.xlu0 %v1119, 126
        %v1125 = vpop.permute.xlu0 %1124
        %v1128 = vadd.f32 %v1115, %v1123
        %v1129 = vadd.f32 %v1116, %v1125
        %s1130 = sld [smem:[#allocation5]]
        %v1131 = vstv %s1130
        %v1132 = vadd.f32 %v1128, %v1131
        %v1133 = vadd.f32 %v1129, %v1131
        %v1134 = vmax.f32 %v1132, 0.0
        %v1135 = vmax.f32 %v1133, 0.0
        %vm1136 = vcmask 113664
        %1137 = vst.msk [vmem:[#allocation3] sm:$0xff] %vm1136, %v1134
        %vm1138 = vcmask 111616
        %1139 = vst.msk [vmem:[#allocation3 + $0x8] sm:$0x3f] %vm1138, %v1135
        %v1140 = vld [vmem:[#allocation3] sm:$0xff]
        %v1141 = vld [vmem:[#allocation3 + $0x8] sm:$0xf]
        %v1142 = vstv %s394
        %v1143 = vmul.f32 %v1140, %v1142
        %v1144 = vmul.f32 %v1141, %v1142
        %v1145 = vadd.f32 %v1143, 0.0
        %v1146 = vadd.f32 %v1144, 0.0
        %v1147 = vstv %s395
        %v1148 = vmul.f32 %v1140, %v1147
        %v1149 = vmul.f32 %v1141, %v1147
        %1152 = vrot.lane.b32.xlu0 %v1148, 127
        %v1153 = vpop.permute.xlu0 %1152
        %1154 = vrot.lane.b32.xlu0 %v1149, 127
        %v1155 = vpop.permute.xlu0 %1154
        %v1158 = vadd.f32 %v1145, %v1153
        %v1159 = vadd.f32 %v1146, %v1155
        %v1160 = vstv %s396
        %v1161 = vmul.f32 %v1140, %v1160
        %v1162 = vmul.f32 %v1141, %v1160
        %1165 = vrot.lane.b32.xlu0 %v1161, 126
        %v1166 = vpop.permute.xlu0 %1165
        %1167 = vrot.lane.b32.xlu0 %v1162, 126
        %v1168 = vpop.permute.xlu0 %1167
        %v1171 = vadd.f32 %v1158, %v1166
        %v1172 = vadd.f32 %v1159, %v1168
        %v1173 = vld [vmem:[#allocation3 + $0x1] sm:$0xff]
        %v1174 = vld [vmem:[#allocation3 + $0x9] sm:$0xf]
        %v1175 = vstv %s397
        %v1176 = vmul.f32 %v1173, %v1175
        %v1177 = vmul.f32 %v1174, %v1175
        %v1178 = vadd.f32 %v1171, %v1176
        %v1179 = vadd.f32 %v1172, %v1177
        %v1180 = vstv %s398
        %v1181 = vmul.f32 %v1173, %v1180
        %v1182 = vmul.f32 %v1174, %v1180
        %1185 = vrot.lane.b32.xlu0 %v1181, 127
        %v1186 = vpop.permute.xlu0 %1185
        %1187 = vrot.lane.b32.xlu0 %v1182, 127
        %v1188 = vpop.permute.xlu0 %1187
        %v1191 = vadd.f32 %v1178, %v1186
        %v1192 = vadd.f32 %v1179, %v1188
        %v1193 = vstv %s399
        %v1194 = vmul.f32 %v1173, %v1193
        %v1195 = vmul.f32 %v1174, %v1193
        %1198 = vrot.lane.b32.xlu0 %v1194, 126
        %v1199 = vpop.permute.xlu0 %1198
        %1200 = vrot.lane.b32.xlu0 %v1195, 126
        %v1201 = vpop.permute.xlu0 %1200
        %v1204 = vadd.f32 %v1191, %v1199
        %v1205 = vadd.f32 %v1192, %v1201
        %v1206 = vld [vmem:[#allocation3 + $0x2] sm:$0xff]
        %v1207 = vld [vmem:[#allocation3 + $0xa] sm:$0xf]
        %v1208 = vstv %s400
        %v1209 = vmul.f32 %v1206, %v1208
        %v1210 = vmul.f32 %v1207, %v1208
        %v1211 = vadd.f32 %v1204, %v1209
        %v1212 = vadd.f32 %v1205, %v1210
        %v1213 = vstv %s401
        %v1214 = vmul.f32 %v1206, %v1213
        %v1215 = vmul.f32 %v1207, %v1213
        %1218 = vrot.lane.b32.xlu0 %v1214, 127
        %v1219 = vpop.permute.xlu0 %1218
        %1220 = vrot.lane.b32.xlu0 %v1215, 127
        %v1221 = vpop.permute.xlu0 %1220
        %v1224 = vadd.f32 %v1211, %v1219
        %v1225 = vadd.f32 %v1212, %v1221
        %v1226 = vstv %s402
        %v1227 = vmul.f32 %v1206, %v1226
        %v1228 = vmul.f32 %v1207, %v1226
        %1231 = vrot.lane.b32.xlu0 %v1227, 126
        %v1232 = vpop.permute.xlu0 %1231
        %1233 = vrot.lane.b32.xlu0 %v1228, 126
        %v1234 = vpop.permute.xlu0 %1233
        %v1237 = vadd.f32 %v1224, %v1232
        %v1238 = vadd.f32 %v1225, %v1234
        %s1239 = sld [smem:[#allocation6]]
        %v1240 = vstv %s1239
        %v1241 = vadd.f32 %v1237, %v1240
        %v1242 = vadd.f32 %v1238, %v1240
        %v1243 = vmax.f32 %v1241, 0.0
        %v1244 = vmax.f32 %v1242, 0.0
        %vm1245 = vcmask 97280
        %1246 = vst.msk [vmem:[%s367] sm:$0xff] %vm1245, %v1243
        %vm1247 = vcmask 93184
        %1248 = vst.msk [vmem:[%s367 + $0x8] sm:$0xf] %vm1247, %v1244
        %p1249 = scmp.lt.s32.totalorder %s24, 1
        %s1250 = scalar_select %p1249, %s24, 1
        %s1251 = smul.addr %s1250, 2
        %s1252 = smul.addr %s1251, 8
        %s1253 = scalar_lea.vmem %s8, %s1252
        // Predicated region
        $region65: #{tpu_custom_call.1} parent=51 // pred_check
          %p1254 = pneg %p220
        $region66: #{tpu_custom_call.1} parent=51 // pred_check_branch
          %1256 = sbr.rel (%p1254) target = $region68
        $region67: #{tpu_custom_call.1} parent=51 // pred_region
          _
        $region68: #{tpu_custom_call.1} parent=51 // pred_fallthru
          _
      $region52: #{tpu_custom_call.1} parent=5 // pred_fallthru
        _
      %p1257 = scmp.le.s32.totalorder 2, %s19
      // Predicated region
      $region69: #{tpu_custom_call.1} parent=5 // pred_check
        %p1258 = pneg %p1257
      $region70: #{tpu_custom_call.1} parent=5 // pred_check_branch
        %1260 = sbr.rel (%p1258) target = $region72
      $region71: #{tpu_custom_call.1} parent=5 // pred_region
        %s1261 = ssub.s32 %s19, 2
        // Predicated region
        $region73: #{tpu_custom_call.1} parent=71 // pred_check
          %p1262 = pneg %p226
        $region74: #{tpu_custom_call.1} parent=71 // pred_check_branch
          %1264 = sbr.rel (%p1262) target = $region76
        $region75: #{tpu_custom_call.1} parent=71 // pred_region
          %p1265 = scmp.lt.s32.totalorder %s25, 1
          %s1266 = scalar_select %p1265, %s25, 1
          %s1267 = smul.addr %s1266, 2
          %s1268 = smul.addr %s1267, 8
          %s1269 = scalar_lea.vmem %s8, %s1268
        $region76: #{tpu_custom_call.1} parent=71 // pred_fallthru
          _
      $region72: #{tpu_custom_call.1} parent=5 // pred_fallthru
        _
    $region6: #{tpu_custom_call.1} parent=1 // loop_footer
      %s23 = sadd.s32 1, %s19
    $region7: #{tpu_custom_call.1} parent=1 // loop_footer_branch
      %18 = sbr.rel target = $region3
    $region8: #{tpu_custom_call.1} parent=1 // loop_exit
      _
    %1270 = vsyncpa [#allocation8], 1
    %s1271 = scalar_lea.sflag [#allocation8], 1
    %1272 = vsyncpa %s1271, 1
    %1273 = vsyncpa [#allocation10], 1

</llo_original>
